<compile_context>
chip_gen: v6e
topology: v6e:2x2x1
jax: 0.10.0
libtpu: 0.0.40
codegen_flags: <defaults>
</compile_context>

<pallas_src>
import functools

import jax
import jax.numpy as jnp
from jax import lax
from jax.experimental import pallas as pl
from jax.experimental.pallas import tpu as pltpu

NUM_LEVELS = 256  # embedding rows (pixel intensity levels)


def _round_up(a, b):
    return ((a + b - 1) // b) * b


def _p2be_kernel(x_ref, emb_ref, o_ref):
    # x_ref:   (bc_tile, tile_hw)      f32  pixel values (nominally in [0, 1])
    # emb_ref: (m, 256)                bf16 pre-binarized, transposed table
    # o_ref:   (bc_tile, m, tile_hw)   output, lane-dense last dim
    bc_tile, tile_hw = x_ref.shape

    x = x_ref[...]                                           # (bc_tile, T)
    # Truncation matches torch .long(); clamp so out-of-range pixels never
    # produce an all-zero one-hot row (PyTorch would raise on OOB indices).
    idx = jnp.clip((x * 255.0).astype(jnp.int32), 0, NUM_LEVELS - 1)

    levels = lax.broadcasted_iota(jnp.int32, (NUM_LEVELS, tile_hw), 0)  # (256, T)
    emb = emb_ref[...]                                       # (m, 256) bf16

    # One row (one image/channel) at a time: one-hot gather on the MXU.
    # bc_tile is a small static constant (8), so this fully unrolls.
    for r in range(bc_tile):
        onehot = (idx[r][None, :] == levels).astype(jnp.bfloat16)       # (256, T)
        vals = jnp.dot(emb, onehot, preferred_element_type=jnp.float32)  # (m, T)
        o_ref[r] = vals.astype(o_ref.dtype)


def p2be_forward(x, embedding, *, max_tile_hw=2048, bc_tile=8,
                 out_dtype=jnp.float32):
    """x: (b, c, h, w) f32 in [0,1]; embedding: (256, m) -> (b, c*m, h, w)."""
    b, c, h, w = x.shape
    m = embedding.shape[1]
    bc = b * c
    hw = h * w

    # Pre-binarize the table (sign and gather commute).  Values {0, 0.5, 1}
    # are exactly representable in bf16, so the bf16 matmul is exact.
    emb_bin_t = ((jnp.sign(embedding.astype(jnp.float32)) + 1.0) * 0.5)
    emb_bin_t = emb_bin_t.T.astype(jnp.bfloat16)             # (m, 256)

    # Lane-dense spatial tile (multiple of 128), sublane-friendly bc tile.
    tile_hw = min(max_tile_hw, _round_up(hw, 128))
    hw_pad = _round_up(hw, tile_hw)
    bc_pad = _round_up(bc, bc_tile)

    x2 = x.reshape(bc, hw).astype(jnp.float32)
    if bc_pad != bc or hw_pad != hw:
        x2 = jnp.pad(x2, ((0, bc_pad - bc), (0, hw_pad - hw)))

    out = pl.pallas_call(
        _p2be_kernel,
        out_shape=jax.ShapeDtypeStruct((bc_pad, m, hw_pad), out_dtype),
        grid_spec=pltpu.PrefetchScalarGridSpec(
            num_scalar_prefetch=0,
            grid=(bc_pad // bc_tile, hw_pad // tile_hw),
            in_specs=[
                pl.BlockSpec((bc_tile, tile_hw), lambda i, j: (i, j)),
                pl.BlockSpec((m, NUM_LEVELS), lambda i, j: (0, 0)),
            ],
            out_specs=pl.BlockSpec((bc_tile, m, tile_hw), lambda i, j: (i, 0, j)),
        ),
        compiler_params=pltpu.CompilerParams(
            dimension_semantics=("parallel", "parallel"),
        ),
    )(x2, emb_bin_t)

    # Drop padding; remaining glue is pure reshape (the permute is fused).
    out = out[:bc, :, :hw]                       # (bc, m, hw)
    return out.reshape(b, c, m, h, w).reshape(b, c * m, h, w)


if __name__ == "__main__":
    key = jax.random.PRNGKey(0)
    k_emb, k_x = jax.random.split(key)

    m = 32
    # init='normal' in the PyTorch module: embedding ~ N(0, 1), shape (256, m)
    embedding = jax.random.normal(k_emb, (NUM_LEVELS, m), dtype=jnp.float32)

    # Small NCHW input consistent with the module's forward: (b=2, c=4, h=16, w=16)
    x = jax.random.uniform(k_x, (2, 4, 16, 16), dtype=jnp.float32)

    out = p2be_forward(x, embedding)
    jax.block_until_ready(out)

    # Pure-JAX reference with identical semantics.
    idx = jnp.clip((x * 255.0).astype(jnp.int32), 0, 255).reshape(-1)
    ref = embedding[idx].reshape(2, 4, 16, 16, m)
    ref = jnp.transpose(ref, (0, 1, 4, 2, 3)).reshape(2, 4 * m, 16, 16)
    ref = (jnp.sign(ref) + 1.0) * 0.5
    assert out.shape == (2, 4 * m, 16, 16)
    assert jnp.allclose(out, ref), "mismatch vs reference"

    # TODO(synk): backward-pass STE gradient and embedding_smoothness() are not
    # part of the forward pass and are not implemented as kernels.
    print("KERNEL_OK")
</pallas_src>

<mosaic_0001>
module attributes {stable_mosaic.version = 11 : i64} {
  func.func @_p2be_kernel(%arg0: i32, %arg1: i32, %arg2: memref<8x256xf32, #tpu.memory_space<vmem>>, %arg3: memref<32x256xbf16, #tpu.memory_space<vmem>>, %arg4: memref<8x32x256xf32, #tpu.memory_space<vmem>>) attributes {dimension_semantics = [#tpu.dimension_semantics<parallel>, #tpu.dimension_semantics<parallel>], iteration_bounds = array<i64: 1, 1>, scalar_prefetch = 0 : i64, scratch_operands = 0 : i64, tpu.core_type = #tpu.core_type<tc>, window_params = [{transform_indices = @transform_0, window_bounds = array<i64: 8, 256>}, {pipeline_mode = #tpu.pipeline_mode<synchronous>, transform_indices = @transform_1, window_bounds = array<i64: 32, 256>}, {transform_indices = @transform_2, window_bounds = array<i64: 8, 32, 256>}]} {
    %c0 = arith.constant 0 : index
    %c0_0 = arith.constant 0 : index
    %0 = vector.load %arg2[%c0, %c0_0] : memref<8x256xf32, #tpu.memory_space<vmem>>, vector<8x256xf32>
    %cst = arith.constant 2.550000e+02 : f32
    %1 = vector.broadcast %cst : f32 to vector<8x256xf32>
    %2 = arith.mulf %0, %1 : vector<8x256xf32>
    %3 = arith.fptosi %2 : vector<8x256xf32> to vector<8x256xi32>
    %c0_i32 = arith.constant 0 : i32
    %c255_i32 = arith.constant 255 : i32
    %4 = vector.broadcast %c0_i32 : i32 to vector<8x256xi32>
    %5 = arith.maxsi %4, %3 : vector<8x256xi32>
    %6 = vector.broadcast %c255_i32 : i32 to vector<8x256xi32>
    %7 = arith.minsi %6, %5 : vector<8x256xi32>
    %8 = tpu.iota {dimensions = array<i32: 0>} : vector<256x256xi32>
    %c0_1 = arith.constant 0 : index
    %c0_2 = arith.constant 0 : index
    %9 = vector.load %arg3[%c0_1, %c0_2] : memref<32x256xbf16, #tpu.memory_space<vmem>>, vector<32x256xbf16>
    %10 = vector.extract_strided_slice %7 {offsets = [0, 0], sizes = [1, 256], strides = [1, 1]} : vector<8x256xi32> to vector<1x256xi32>
    %11 = vector.shape_cast %10 : vector<1x256xi32> to vector<256xi32>
    %12 = vector.shape_cast %11 : vector<256xi32> to vector<1x256xi32>
    %13 = vector.broadcast %12 : vector<1x256xi32> to vector<256x256xi32>
    %14 = arith.cmpi eq, %13, %8 : vector<256x256xi32>
    %15 = arith.extui %14 : vector<256x256xi1> to vector<256x256xi32>
    %16 = arith.sitofp %15 : vector<256x256xi32> to vector<256x256xf32>
    %17 = arith.truncf %16 : vector<256x256xf32> to vector<256x256xbf16>
    %cst_3 = arith.constant dense<0.000000e+00> : vector<32x256xf32>
    %18 = tpu.matmul %9, %17, %cst_3 {dimension_numbers = #tpu.dot_dimension_numbers<[1], [0], [0], [1], [0, 0, 1, 1], [], []>} : vector<32x256xbf16>, vector<256x256xbf16>, vector<32x256xf32> -> vector<32x256xf32>
    %c0_4 = arith.constant 0 : index
    %c0_5 = arith.constant 0 : index
    %c0_6 = arith.constant 0 : index
    %19 = vector.load %arg4[%c0_4, %c0_5, %c0_6] : memref<8x32x256xf32, #tpu.memory_space<vmem>>, vector<1x32x256xf32>
    %20 = vector.shape_cast %19 : vector<1x32x256xf32> to vector<32x256xf32>
    %21 = vector.shape_cast %18 : vector<32x256xf32> to vector<1x32x256xf32>
    tpu.vector_store %arg4[%c0_4, %c0_5, %c0_6], %21 {strides = array<i32>} : memref<8x32x256xf32, #tpu.memory_space<vmem>>, vector<1x32x256xf32>,
    %22 = vector.extract_strided_slice %7 {offsets = [1, 0], sizes = [1, 256], strides = [1, 1]} : vector<8x256xi32> to vector<1x256xi32>
    %23 = vector.shape_cast %22 : vector<1x256xi32> to vector<256xi32>
    %24 = vector.shape_cast %23 : vector<256xi32> to vector<1x256xi32>
    %25 = vector.broadcast %24 : vector<1x256xi32> to vector<256x256xi32>
    %26 = arith.cmpi eq, %25, %8 : vector<256x256xi32>
    %27 = arith.extui %26 : vector<256x256xi1> to vector<256x256xi32>
    %28 = arith.sitofp %27 : vector<256x256xi32> to vector<256x256xf32>
    %29 = arith.truncf %28 : vector<256x256xf32> to vector<256x256xbf16>
    %cst_7 = arith.constant dense<0.000000e+00> : vector<32x256xf32>
    %30 = tpu.matmul %9, %29, %cst_7 {dimension_numbers = #tpu.dot_dimension_numbers<[1], [0], [0], [1], [0, 0, 1, 1], [], []>} : vector<32x256xbf16>, vector<256x256xbf16>, vector<32x256xf32> -> vector<32x256xf32>
    %c1 = arith.constant 1 : index
    %c0_8 = arith.constant 0 : index
    %c0_9 = arith.constant 0 : index
    %31 = vector.load %arg4[%c1, %c0_8, %c0_9] : memref<8x32x256xf32, #tpu.memory_space<vmem>>, vector<1x32x256xf32>
    %32 = vector.shape_cast %31 : vector<1x32x256xf32> to vector<32x256xf32>
    %33 = vector.shape_cast %30 : vector<32x256xf32> to vector<1x32x256xf32>
    tpu.vector_store %arg4[%c1, %c0_8, %c0_9], %33 {strides = array<i32>} : memref<8x32x256xf32, #tpu.memory_space<vmem>>, vector<1x32x256xf32>,
    %34 = vector.extract_strided_slice %7 {offsets = [2, 0], sizes = [1, 256], strides = [1, 1]} : vector<8x256xi32> to vector<1x256xi32>
    %35 = vector.shape_cast %34 : vector<1x256xi32> to vector<256xi32>
    %36 = vector.shape_cast %35 : vector<256xi32> to vector<1x256xi32>
    %37 = vector.broadcast %36 : vector<1x256xi32> to vector<256x256xi32>
    %38 = arith.cmpi eq, %37, %8 : vector<256x256xi32>
    %39 = arith.extui %38 : vector<256x256xi1> to vector<256x256xi32>
    %40 = arith.sitofp %39 : vector<256x256xi32> to vector<256x256xf32>
    %41 = arith.truncf %40 : vector<256x256xf32> to vector<256x256xbf16>
    %cst_10 = arith.constant dense<0.000000e+00> : vector<32x256xf32>
    %42 = tpu.matmul %9, %41, %cst_10 {dimension_numbers = #tpu.dot_dimension_numbers<[1], [0], [0], [1], [0, 0, 1, 1], [], []>} : vector<32x256xbf16>, vector<256x256xbf16>, vector<32x256xf32> -> vector<32x256xf32>
    %c2 = arith.constant 2 : index
    %c0_11 = arith.constant 0 : index
    %c0_12 = arith.constant 0 : index
    %43 = vector.load %arg4[%c2, %c0_11, %c0_12] : memref<8x32x256xf32, #tpu.memory_space<vmem>>, vector<1x32x256xf32>
    %44 = vector.shape_cast %43 : vector<1x32x256xf32> to vector<32x256xf32>
    %45 = vector.shape_cast %42 : vector<32x256xf32> to vector<1x32x256xf32>
    tpu.vector_store %arg4[%c2, %c0_11, %c0_12], %45 {strides = array<i32>} : memref<8x32x256xf32, #tpu.memory_space<vmem>>, vector<1x32x256xf32>,
    %46 = vector.extract_strided_slice %7 {offsets = [3, 0], sizes = [1, 256], strides = [1, 1]} : vector<8x256xi32> to vector<1x256xi32>
    %47 = vector.shape_cast %46 : vector<1x256xi32> to vector<256xi32>
    %48 = vector.shape_cast %47 : vector<256xi32> to vector<1x256xi32>
    %49 = vector.broadcast %48 : vector<1x256xi32> to vector<256x256xi32>
    %50 = arith.cmpi eq, %49, %8 : vector<256x256xi32>
    %51 = arith.extui %50 : vector<256x256xi1> to vector<256x256xi32>
    %52 = arith.sitofp %51 : vector<256x256xi32> to vector<256x256xf32>
    %53 = arith.truncf %52 : vector<256x256xf32> to vector<256x256xbf16>
    %cst_13 = arith.constant dense<0.000000e+00> : vector<32x256xf32>
    %54 = tpu.matmul %9, %53, %cst_13 {dimension_numbers = #tpu.dot_dimension_numbers<[1], [0], [0], [1], [0, 0, 1, 1], [], []>} : vector<32x256xbf16>, vector<256x256xbf16>, vector<32x256xf32> -> vector<32x256xf32>
    %c3 = arith.constant 3 : index
    %c0_14 = arith.constant 0 : index
    %c0_15 = arith.constant 0 : index
    %55 = vector.load %arg4[%c3, %c0_14, %c0_15] : memref<8x32x256xf32, #tpu.memory_space<vmem>>, vector<1x32x256xf32>
    %56 = vector.shape_cast %55 : vector<1x32x256xf32> to vector<32x256xf32>
    %57 = vector.shape_cast %54 : vector<32x256xf32> to vector<1x32x256xf32>
    tpu.vector_store %arg4[%c3, %c0_14, %c0_15], %57 {strides = array<i32>} : memref<8x32x256xf32, #tpu.memory_space<vmem>>, vector<1x32x256xf32>,
    %58 = vector.extract_strided_slice %7 {offsets = [4, 0], sizes = [1, 256], strides = [1, 1]} : vector<8x256xi32> to vector<1x256xi32>
    %59 = vector.shape_cast %58 : vector<1x256xi32> to vector<256xi32>
    %60 = vector.shape_cast %59 : vector<256xi32> to vector<1x256xi32>
    %61 = vector.broadcast %60 : vector<1x256xi32> to vector<256x256xi32>
    %62 = arith.cmpi eq, %61, %8 : vector<256x256xi32>
    %63 = arith.extui %62 : vector<256x256xi1> to vector<256x256xi32>
    %64 = arith.sitofp %63 : vector<256x256xi32> to vector<256x256xf32>
    %65 = arith.truncf %64 : vector<256x256xf32> to vector<256x256xbf16>
    %cst_16 = arith.constant dense<0.000000e+00> : vector<32x256xf32>
    %66 = tpu.matmul %9, %65, %cst_16 {dimension_numbers = #tpu.dot_dimension_numbers<[1], [0], [0], [1], [0, 0, 1, 1], [], []>} : vector<32x256xbf16>, vector<256x256xbf16>, vector<32x256xf32> -> vector<32x256xf32>
    %c4 = arith.constant 4 : index
    %c0_17 = arith.constant 0 : index
    %c0_18 = arith.constant 0 : index
    %67 = vector.load %arg4[%c4, %c0_17, %c0_18] : memref<8x32x256xf32, #tpu.memory_space<vmem>>, vector<1x32x256xf32>
    %68 = vector.shape_cast %67 : vector<1x32x256xf32> to vector<32x256xf32>
    %69 = vector.shape_cast %66 : vector<32x256xf32> to vector<1x32x256xf32>
    tpu.vector_store %arg4[%c4, %c0_17, %c0_18], %69 {strides = array<i32>} : memref<8x32x256xf32, #tpu.memory_space<vmem>>, vector<1x32x256xf32>,
    %70 = vector.extract_strided_slice %7 {offsets = [5, 0], sizes = [1, 256], strides = [1, 1]} : vector<8x256xi32> to vector<1x256xi32>
    %71 = vector.shape_cast %70 : vector<1x256xi32> to vector<256xi32>
    %72 = vector.shape_cast %71 : vector<256xi32> to vector<1x256xi32>
    %73 = vector.broadcast %72 : vector<1x256xi32> to vector<256x256xi32>
    %74 = arith.cmpi eq, %73, %8 : vector<256x256xi32>
    %75 = arith.extui %74 : vector<256x256xi1> to vector<256x256xi32>
    %76 = arith.sitofp %75 : vector<256x256xi32> to vector<256x256xf32>
    %77 = arith.truncf %76 : vector<256x256xf32> to vector<256x256xbf16>
    %cst_19 = arith.constant dense<0.000000e+00> : vector<32x256xf32>
    %78 = tpu.matmul %9, %77, %cst_19 {dimension_numbers = #tpu.dot_dimension_numbers<[1], [0], [0], [1], [0, 0, 1, 1], [], []>} : vector<32x256xbf16>, vector<256x256xbf16>, vector<32x256xf32> -> vector<32x256xf32>
    %c5 = arith.constant 5 : index
    %c0_20 = arith.constant 0 : index
    %c0_21 = arith.constant 0 : index
    %79 = vector.load %arg4[%c5, %c0_20, %c0_21] : memref<8x32x256xf32, #tpu.memory_space<vmem>>, vector<1x32x256xf32>
    %80 = vector.shape_cast %79 : vector<1x32x256xf32> to vector<32x256xf32>
    %81 = vector.shape_cast %78 : vector<32x256xf32> to vector<1x32x256xf32>
    tpu.vector_store %arg4[%c5, %c0_20, %c0_21], %81 {strides = array<i32>} : memref<8x32x256xf32, #tpu.memory_space<vmem>>, vector<1x32x256xf32>,
    %82 = vector.extract_strided_slice %7 {offsets = [6, 0], sizes = [1, 256], strides = [1, 1]} : vector<8x256xi32> to vector<1x256xi32>
    %83 = vector.shape_cast %82 : vector<1x256xi32> to vector<256xi32>
    %84 = vector.shape_cast %83 : vector<256xi32> to vector<1x256xi32>
    %85 = vector.broadcast %84 : vector<1x256xi32> to vector<256x256xi32>
    %86 = arith.cmpi eq, %85, %8 : vector<256x256xi32>
    %87 = arith.extui %86 : vector<256x256xi1> to vector<256x256xi32>
    %88 = arith.sitofp %87 : vector<256x256xi32> to vector<256x256xf32>
    %89 = arith.truncf %88 : vector<256x256xf32> to vector<256x256xbf16>
    %cst_22 = arith.constant dense<0.000000e+00> : vector<32x256xf32>
    %90 = tpu.matmul %9, %89, %cst_22 {dimension_numbers = #tpu.dot_dimension_numbers<[1], [0], [0], [1], [0, 0, 1, 1], [], []>} : vector<32x256xbf16>, vector<256x256xbf16>, vector<32x256xf32> -> vector<32x256xf32>
    %c6 = arith.constant 6 : index
    %c0_23 = arith.constant 0 : index
    %c0_24 = arith.constant 0 : index
    %91 = vector.load %arg4[%c6, %c0_23, %c0_24] : memref<8x32x256xf32, #tpu.memory_space<vmem>>, vector<1x32x256xf32>
    %92 = vector.shape_cast %91 : vector<1x32x256xf32> to vector<32x256xf32>
    %93 = vector.shape_cast %90 : vector<32x256xf32> to vector<1x32x256xf32>
    tpu.vector_store %arg4[%c6, %c0_23, %c0_24], %93 {strides = array<i32>} : memref<8x32x256xf32, #tpu.memory_space<vmem>>, vector<1x32x256xf32>,
    %94 = vector.extract_strided_slice %7 {offsets = [7, 0], sizes = [1, 256], strides = [1, 1]} : vector<8x256xi32> to vector<1x256xi32>
    %95 = vector.shape_cast %94 : vector<1x256xi32> to vector<256xi32>
    %96 = vector.shape_cast %95 : vector<256xi32> to vector<1x256xi32>
    %97 = vector.broadcast %96 : vector<1x256xi32> to vector<256x256xi32>
    %98 = arith.cmpi eq, %97, %8 : vector<256x256xi32>
    %99 = arith.extui %98 : vector<256x256xi1> to vector<256x256xi32>
    %100 = arith.sitofp %99 : vector<256x256xi32> to vector<256x256xf32>
    %101 = arith.truncf %100 : vector<256x256xf32> to vector<256x256xbf16>
    %cst_25 = arith.constant dense<0.000000e+00> : vector<32x256xf32>
    %102 = tpu.matmul %9, %101, %cst_25 {dimension_numbers = #tpu.dot_dimension_numbers<[1], [0], [0], [1], [0, 0, 1, 1], [], []>} : vector<32x256xbf16>, vector<256x256xbf16>, vector<32x256xf32> -> vector<32x256xf32>
    %c7 = arith.constant 7 : index
    %c0_26 = arith.constant 0 : index
    %c0_27 = arith.constant 0 : index
    %103 = vector.load %arg4[%c7, %c0_26, %c0_27] : memref<8x32x256xf32, #tpu.memory_space<vmem>>, vector<1x32x256xf32>
    %104 = vector.shape_cast %103 : vector<1x32x256xf32> to vector<32x256xf32>
    %105 = vector.shape_cast %102 : vector<32x256xf32> to vector<1x32x256xf32>
    tpu.vector_store %arg4[%c7, %c0_26, %c0_27], %105 {strides = array<i32>} : memref<8x32x256xf32, #tpu.memory_space<vmem>>, vector<1x32x256xf32>,
    return
  }
  func.func @transform_0(%arg0: i32, %arg1: i32) -> (i32, i32) {
    %c0_i32 = arith.constant 0 : i32
    return %arg0, %arg1 : i32, i32
  }
  func.func @transform_1(%arg0: i32, %arg1: i32) -> (i32, i32) {
    %c0_i32 = arith.constant 0 : i32
    %c0_i32_0 = arith.constant 0 : i32
    %c0_i32_1 = arith.constant 0 : i32
    return %c0_i32, %c0_i32_0 : i32, i32
  }
  func.func @transform_2(%arg0: i32, %arg1: i32) -> (i32, i32, i32) {
    %c0_i32 = arith.constant 0 : i32
    %c0_i32_0 = arith.constant 0 : i32
    return %arg0, %c0_i32, %arg1 : i32, i32, i32
  }
}

</mosaic_0001>

<llo_original>
// kernel: tpu_custom_call.1
$region0: #{tpu_custom_call.1}
  #allocation0 [shape = 'u32[]', space=smem, size = 0x4, offset = 0x4, fixed_abs, tag = 'smem constant byte address 0x4 - core index']
  #allocation1 [shape = 'u32[144,128]{1,0:T(1,128)}', space=vmem, size = 0x12000, scoped, tag = 'internal scratch']
  %s0 = inlined_call_operand.hbm [shape: f32[8,256], index: 0, kind: input, shape index: {}]
  %s1 = inlined_call_operand.hbm [shape: bf16[32,256], index: 1, kind: input, shape index: {}]
  %s2 = inlined_call_operand.hbm [shape: f32[8,32,256], index: 2, kind: output, shape index: {}]
  %s3 = sld [smem:[#allocation0]]
  $region26: #{tpu_custom_call.1} parent=0
    _
  %s5 = ssub.s32 1, %s3
  %s6 = scalar_select 0, %s5, %s3
  $region1: #{tpu_custom_call.1} parent=0
    #allocation2 [shape = 'u8[8192]{0}', space=vmem, size = 0x2000, scoped, tag = 'input window, operand 0, single buffered']
    #allocation3 [shape = 's32[1]{0}', space=sflag, size = 0x4, scoped, tag = 'scoped memory for tpu_custom_call.1']
    #allocation4 [shape = 's32[1]{0}', space=sflag, size = 0x4, scoped, tag = 'scoped memory for tpu_custom_call.1']
    #allocation5 [shape = 'u8[16384]{0}', space=vmem, size = 0x4000, scoped, tag = 'input window, operand 1, single buffered']
    #allocation6 [shape = 's32[1]{0}', space=sflag, size = 0x4, scoped, tag = 'scoped memory for tpu_custom_call.1']
    #allocation7 [shape = 'u8[262144]{0}', space=vmem, size = 0x40000, scoped, tag = 'output window, operand 0, single buffered']
    %7 = vsyncpa [#allocation3], 0
    %8 = vsyncpa [#allocation6], 0
    %9 = vsyncpa [#allocation4], 0
    // Predicated region
    $region2: #{tpu_custom_call.1} parent=1 // pred_check
      _
    $region3: #{tpu_custom_call.1} parent=1 // pred_check_branch
      %11 = sbr.rel (0) target = $region5
    $region4: #{tpu_custom_call.1} parent=1 // pred_region
      %s13 = ssub.s32 256, 256
      %14 = vsyncadd [#allocation3], %s13
      %s16 = sshll.u32 [#allocation2], 4
      %s17 = int_to_ptr.vmem [resolvable:$true] %s16
      %19 = dma.hbm_to_vmem [thread:$0]  %s0, 256, %s17, [#allocation3]
    $region5: #{tpu_custom_call.1} parent=1 // pred_fallthru
      _
    // Predicated region
    $region6: #{tpu_custom_call.1} parent=1 // pred_check
      _
    $region7: #{tpu_custom_call.1} parent=1 // pred_check_branch
      %21 = sbr.rel (0) target = $region9
    $region8: #{tpu_custom_call.1} parent=1 // pred_region
      %s23 = ssub.s32 512, 512
      %24 = vsyncadd [#allocation6], %s23
      %s25 = sshll.u32 [#allocation5], 4
      %s26 = int_to_ptr.vmem [resolvable:$true] %s25
      %31 = dma.hbm_to_vmem [thread:$0]  %s1, 512, %s26, [#allocation6], 128, 128, 8
    $region9: #{tpu_custom_call.1} parent=1 // pred_fallthru
      _
    // Predicated region
    $region10: #{tpu_custom_call.1} parent=1 // pred_check
      _
    $region11: #{tpu_custom_call.1} parent=1 // pred_check_branch
      %33 = sbr.rel (0) target = $region13
    $region12: #{tpu_custom_call.1} parent=1 // pred_region
      %34 = dma.done [#allocation3], 256
    $region13: #{tpu_custom_call.1} parent=1 // pred_fallthru
      _
    // Predicated region
    $region14: #{tpu_custom_call.1} parent=1 // pred_check
      _
    $region15: #{tpu_custom_call.1} parent=1 // pred_check_branch
      %36 = sbr.rel (0) target = $region17
    $region16: #{tpu_custom_call.1} parent=1 // pred_region
      %37 = dma.done [#allocation6], 512
    $region17: #{tpu_custom_call.1} parent=1 // pred_fallthru
      _
    %v38 = vld [vmem:[#allocation2] sm:$0xff]
    %v39 = vld [vmem:[#allocation2 + $0x8] sm:$0xff]
    %v40 = vmul.f32 %v38, 255.0
    %v41 = vmul.f32 %v39, 255.0
    %v42 = vcvt.f32.s32.to.zero.pseudo %v40
    %v43 = vcvt.f32.s32.to.zero.pseudo %v41
    %vm44 = vcmp.gt.s32.totalorder %v42, 0
    %v45 = vsel %vm44, %v42, 0
    %vm46 = vcmp.gt.s32.totalorder %v43, 0
    %v47 = vsel %vm46, %v43, 0
    %vm48 = vcmp.lt.s32.totalorder %v45, 255
    %v49 = vsel %vm48, %v45, 255
    %vm50 = vcmp.lt.s32.totalorder %v47, 255
    %v51 = vsel %vm50, %v47, 255
    %v52 = vlaneseq
    %v53 = vshrl.u32 %v52, 7
    %v54 = vadd.s32 %v53, 8
    %v55 = vadd.s32 %v53, 16
    %v56 = vadd.s32 %v53, 24
    %v57 = vadd.s32 %v53, 32
    %v58 = vadd.s32 %v53, 40
    %v59 = vadd.s32 %v53, 48
    %v60 = vadd.s32 %v53, 56
    %v61 = vadd.s32 %v53, 64
    %v62 = vadd.s32 %v53, 72
    %v63 = vadd.s32 %v53, 80
    %v64 = vadd.s32 %v53, 88
    %v65 = vadd.s32 %v53, 96
    %v66 = vadd.s32 %v53, 104
    %v67 = vadd.s32 %v53, 112
    %v68 = vadd.s32 %v53, 120
    %v69 = vadd.s32 %v53, 128
    %v70 = vadd.s32 %v53, 136
    %v71 = vadd.s32 %v53, 144
    %v72 = vadd.s32 %v53, 152
    %v73 = vadd.s32 %v53, 160
    %v74 = vadd.s32 %v53, 168
    %v75 = vadd.s32 %v53, 176
    %v76 = vadd.s32 %v53, 184
    %v77 = vadd.s32 %v53, 192
    %v78 = vadd.s32 %v53, 200
    %v79 = vadd.s32 %v53, 208
    %v80 = vadd.s32 %v53, 216
    %v81 = vadd.s32 %v53, 224
    %v82 = vadd.s32 %v53, 232
    %v83 = vadd.s32 %v53, 240
    %v84 = vadd.s32 %v53, 248
    %v85 = vld [vmem:[#allocation5] sm:$0xff]
    %v86 = vld [vmem:[#allocation5 + $0x8] sm:$0xff]
    %v87 = vld [vmem:[#allocation5 + $0x10] sm:$0xff]
    %v88 = vld [vmem:[#allocation5 + $0x18] sm:$0xff]
    %v89 = vlaneseq
    %v90 = vshrl.u32 %v89, 7
    %v91 = vsub.s32 0, %v90
    %v92 = vrot.slane %v49, %v91
    %v93 = vlaneseq
    %v94 = vshrl.u32 %v93, 7
    %v95 = vsub.s32 0, %v94
    %v96 = vrot.slane %v51, %v95
    %vm97 = vcmp.eq.s32.totalorder %v92, %v53
    %vm98 = vcmp.eq.s32.totalorder %v96, %v53
    %vm99 = vcmp.eq.s32.totalorder %v92, %v54
    %vm100 = vcmp.eq.s32.totalorder %v96, %v54
    %vm101 = vcmp.eq.s32.totalorder %v92, %v55
    %vm102 = vcmp.eq.s32.totalorder %v96, %v55
    %vm103 = vcmp.eq.s32.totalorder %v92, %v56
    %vm104 = vcmp.eq.s32.totalorder %v96, %v56
    %vm105 = vcmp.eq.s32.totalorder %v92, %v57
    %vm106 = vcmp.eq.s32.totalorder %v96, %v57
    %vm107 = vcmp.eq.s32.totalorder %v92, %v58
    %vm108 = vcmp.eq.s32.totalorder %v96, %v58
    %vm109 = vcmp.eq.s32.totalorder %v92, %v59
    %vm110 = vcmp.eq.s32.totalorder %v96, %v59
    %vm111 = vcmp.eq.s32.totalorder %v92, %v60
    %vm112 = vcmp.eq.s32.totalorder %v96, %v60
    %vm113 = vcmp.eq.s32.totalorder %v92, %v61
    %vm114 = vcmp.eq.s32.totalorder %v96, %v61
    %vm115 = vcmp.eq.s32.totalorder %v92, %v62
    %vm116 = vcmp.eq.s32.totalorder %v96, %v62
    %vm117 = vcmp.eq.s32.totalorder %v92, %v63
    %vm118 = vcmp.eq.s32.totalorder %v96, %v63
    %vm119 = vcmp.eq.s32.totalorder %v92, %v64
    %vm120 = vcmp.eq.s32.totalorder %v96, %v64
    %vm121 = vcmp.eq.s32.totalorder %v92, %v65
    %vm122 = vcmp.eq.s32.totalorder %v96, %v65
    %vm123 = vcmp.eq.s32.totalorder %v92, %v66
    %vm124 = vcmp.eq.s32.totalorder %v96, %v66
    %vm125 = vcmp.eq.s32.totalorder %v92, %v67
    %vm126 = vcmp.eq.s32.totalorder %v96, %v67
    %vm127 = vcmp.eq.s32.totalorder %v92, %v68
    %vm128 = vcmp.eq.s32.totalorder %v96, %v68
    %vm129 = vcmp.eq.s32.totalorder %v92, %v69
    %vm130 = vcmp.eq.s32.totalorder %v96, %v69
    %vm131 = vcmp.eq.s32.totalorder %v92, %v70
    %vm132 = vcmp.eq.s32.totalorder %v96, %v70
    %vm133 = vcmp.eq.s32.totalorder %v92, %v71
    %vm134 = vcmp.eq.s32.totalorder %v96, %v71
    %vm135 = vcmp.eq.s32.totalorder %v92, %v72
    %vm136 = vcmp.eq.s32.totalorder %v96, %v72
    %vm137 = vcmp.eq.s32.totalorder %v92, %v73
    %vm138 = vcmp.eq.s32.totalorder %v96, %v73
    %vm139 = vcmp.eq.s32.totalorder %v92, %v74
    %vm140 = vcmp.eq.s32.totalorder %v96, %v74
    %vm141 = vcmp.eq.s32.totalorder %v92, %v75
    %vm142 = vcmp.eq.s32.totalorder %v96, %v75
    %vm143 = vcmp.eq.s32.totalorder %v92, %v76
    %vm144 = vcmp.eq.s32.totalorder %v96, %v76
    %vm145 = vcmp.eq.s32.totalorder %v92, %v77
    %vm146 = vcmp.eq.s32.totalorder %v96, %v77
    %vm147 = vcmp.eq.s32.totalorder %v92, %v78
    %vm148 = vcmp.eq.s32.totalorder %v96, %v78
    %vm149 = vcmp.eq.s32.totalorder %v92, %v79
    %vm150 = vcmp.eq.s32.totalorder %v96, %v79
    %vm151 = vcmp.eq.s32.totalorder %v92, %v80
    %vm152 = vcmp.eq.s32.totalorder %v96, %v80
    %vm153 = vcmp.eq.s32.totalorder %v92, %v81
    %vm154 = vcmp.eq.s32.totalorder %v96, %v81
    %vm155 = vcmp.eq.s32.totalorder %v92, %v82
    %vm156 = vcmp.eq.s32.totalorder %v96, %v82
    %vm157 = vcmp.eq.s32.totalorder %v92, %v83
    %vm158 = vcmp.eq.s32.totalorder %v96, %v83
    %vm159 = vcmp.eq.s32.totalorder %v92, %v84
    %vm160 = vcmp.eq.s32.totalorder %v96, %v84
    %v161 = vsel %vm97, 1, 0
    %v162 = vsel %vm98, 1, 0
    %v163 = vsel %vm99, 1, 0
    %v164 = vsel %vm100, 1, 0
    %v165 = vsel %vm101, 1, 0
    %v166 = vsel %vm102, 1, 0
    %v167 = vsel %vm103, 1, 0
    %v168 = vsel %vm104, 1, 0
    %v169 = vsel %vm105, 1, 0
    %v170 = vsel %vm106, 1, 0
    %v171 = vsel %vm107, 1, 0
    %v172 = vsel %vm108, 1, 0
    %v173 = vsel %vm109, 1, 0
    %v174 = vsel %vm110, 1, 0
    %v175 = vsel %vm111, 1, 0
    %v176 = vsel %vm112, 1, 0
    %v177 = vsel %vm113, 1, 0
    %v178 = vsel %vm114, 1, 0
    %v179 = vsel %vm115, 1, 0
    %v180 = vsel %vm116, 1, 0
    %v181 = vsel %vm117, 1, 0
    %v182 = vsel %vm118, 1, 0
    %v183 = vsel %vm119, 1, 0
    %v184 = vsel %vm120, 1, 0
    %v185 = vsel %vm121, 1, 0
    %v186 = vsel %vm122, 1, 0
    %v187 = vsel %vm123, 1, 0
    %v188 = vsel %vm124, 1, 0
    %v189 = vsel %vm125, 1, 0
    %v190 = vsel %vm126, 1, 0
    %v191 = vsel %vm127, 1, 0
    %v192 = vsel %vm128, 1, 0
    %v193 = vsel %vm129, 1, 0
    %v194 = vsel %vm130, 1, 0
    %v195 = vsel %vm131, 1, 0
    %v196 = vsel %vm132, 1, 0
    %v197 = vsel %vm133, 1, 0
    %v198 = vsel %vm134, 1, 0
    %v199 = vsel %vm135, 1, 0
    %v200 = vsel %vm136, 1, 0
    %v201 = vsel %vm137, 1, 0
    %v202 = vsel %vm138, 1, 0
    %v203 = vsel %vm139, 1, 0
    %v204 = vsel %vm140, 1, 0
    %v205 = vsel %vm141, 1, 0
    %v206 = vsel %vm142, 1, 0
    %v207 = vsel %vm143, 1, 0
    %v208 = vsel %vm144, 1, 0
    %v209 = vsel %vm145, 1, 0
    %v210 = vsel %vm146, 1, 0
    %v211 = vsel %vm147, 1, 0
    %v212 = vsel %vm148, 1, 0
    %v213 = vsel %vm149, 1, 0
    %v214 = vsel %vm150, 1, 0
    %v215 = vsel %vm151, 1, 0
    %v216 = vsel %vm152, 1, 0
    %v217 = vsel %vm153, 1, 0
    %v218 = vsel %vm154, 1, 0
    %v219 = vsel %vm155, 1, 0
    %v220 = vsel %vm156, 1, 0
    %v221 = vsel %vm157, 1, 0
    %v222 = vsel %vm158, 1, 0
    %v223 = vsel %vm159, 1, 0
    %v224 = vsel %vm160, 1, 0
    %v225 = vcvt.s32.f32 %v161
    %v226 = vcvt.s32.f32 %v162
    %v227 = vcvt.s32.f32 %v163
    %v228 = vcvt.s32.f32 %v164
    %v229 = vcvt.s32.f32 %v165
    %v230 = vcvt.s32.f32 %v166
    %v231 = vcvt.s32.f32 %v167
    %v232 = vcvt.s32.f32 %v168
    %v233 = vcvt.s32.f32 %v169
    %v234 = vcvt.s32.f32 %v170
    %v235 = vcvt.s32.f32 %v171
    %v236 = vcvt.s32.f32 %v172
    %v237 = vcvt.s32.f32 %v173
    %v238 = vcvt.s32.f32 %v174
    %v239 = vcvt.s32.f32 %v175
    %v240 = vcvt.s32.f32 %v176
    %v241 = vcvt.s32.f32 %v177
    %v242 = vcvt.s32.f32 %v178
    %v243 = vcvt.s32.f32 %v179
    %v244 = vcvt.s32.f32 %v180
    %v245 = vcvt.s32.f32 %v181
    %v246 = vcvt.s32.f32 %v182
    %v247 = vcvt.s32.f32 %v183
    %v248 = vcvt.s32.f32 %v184
    %v249 = vcvt.s32.f32 %v185
    %v250 = vcvt.s32.f32 %v186
    %v251 = vcvt.s32.f32 %v187
    %v252 = vcvt.s32.f32 %v188
    %v253 = vcvt.s32.f32 %v189
    %v254 = vcvt.s32.f32 %v190
    %v255 = vcvt.s32.f32 %v191
    %v256 = vcvt.s32.f32 %v192
    %v257 = vcvt.s32.f32 %v193
    %v258 = vcvt.s32.f32 %v194
    %v259 = vcvt.s32.f32 %v195
    %v260 = vcvt.s32.f32 %v196
    %v261 = vcvt.s32.f32 %v197
    %v262 = vcvt.s32.f32 %v198
    %v263 = vcvt.s32.f32 %v199
    %v264 = vcvt.s32.f32 %v200
    %v265 = vcvt.s32.f32 %v201
    %v266 = vcvt.s32.f32 %v202
    %v267 = vcvt.s32.f32 %v203
    %v268 = vcvt.s32.f32 %v204
    %v269 = vcvt.s32.f32 %v205
    %v270 = vcvt.s32.f32 %v206
    %v271 = vcvt.s32.f32 %v207
    %v272 = vcvt.s32.f32 %v208
    %v273 = vcvt.s32.f32 %v209
    %v274 = vcvt.s32.f32 %v210
    %v275 = vcvt.s32.f32 %v211
    %v276 = vcvt.s32.f32 %v212
    %v277 = vcvt.s32.f32 %v213
    %v278 = vcvt.s32.f32 %v214
    %v279 = vcvt.s32.f32 %v215
    %v280 = vcvt.s32.f32 %v216
    %v281 = vcvt.s32.f32 %v217
    %v282 = vcvt.s32.f32 %v218
    %v283 = vcvt.s32.f32 %v219
    %v284 = vcvt.s32.f32 %v220
    %v285 = vcvt.s32.f32 %v221
    %v286 = vcvt.s32.f32 %v222
    %v287 = vcvt.s32.f32 %v223
    %v288 = vcvt.s32.f32 %v224
    %v289 = vpack.c.bf16 %v227, %v225
    %v290 = vpack.c.bf16 %v228, %v226
    %v291 = vpack.c.bf16 %v231, %v229
    %v292 = vpack.c.bf16 %v232, %v230
    %v293 = vpack.c.bf16 %v235, %v233
    %v294 = vpack.c.bf16 %v236, %v234
    %v295 = vpack.c.bf16 %v239, %v237
    %v296 = vpack.c.bf16 %v240, %v238
    %v297 = vpack.c.bf16 %v243, %v241
    %v298 = vpack.c.bf16 %v244, %v242
    %v299 = vpack.c.bf16 %v247, %v245
    %v300 = vpack.c.bf16 %v248, %v246
    %v301 = vpack.c.bf16 %v251, %v249
    %v302 = vpack.c.bf16 %v252, %v250
    %v303 = vpack.c.bf16 %v255, %v253
    %v304 = vpack.c.bf16 %v256, %v254
    %v305 = vpack.c.bf16 %v259, %v257
    %v306 = vpack.c.bf16 %v260, %v258
    %v307 = vpack.c.bf16 %v263, %v261
    %v308 = vpack.c.bf16 %v264, %v262
    %v309 = vpack.c.bf16 %v267, %v265
    %v310 = vpack.c.bf16 %v268, %v266
    %v311 = vpack.c.bf16 %v271, %v269
    %v312 = vpack.c.bf16 %v272, %v270
    %v313 = vpack.c.bf16 %v275, %v273
    %v314 = vpack.c.bf16 %v276, %v274
    %v315 = vpack.c.bf16 %v279, %v277
    %v316 = vpack.c.bf16 %v280, %v278
    %v317 = vpack.c.bf16 %v283, %v281
    %v318 = vpack.c.bf16 %v284, %v282
    %v319 = vpack.c.bf16 %v287, %v285
    %v320 = vpack.c.bf16 %v288, %v286
    %v325 = vunpack.c.l.b16 %v85
    %v326 = vunpack.c.h.b16 %v85
    %v327 = vunpack.c.l.b16 %v86
    %v328 = vunpack.c.h.b16 %v86
    %v329 = vunpack.c.l.b16 %v87
    %v330 = vunpack.c.h.b16 %v87
    %v331 = vunpack.c.l.b16 %v88
    %v332 = vunpack.c.h.b16 %v88
    %v333 = vpack.c.b16 %v327, %v325
    %v334 = vpack.c.b16 %v328, %v326
    %v335 = vpack.c.b16 %v331, %v329
    %v336 = vpack.c.b16 %v332, %v330
    %341 = vmatprep.subr.bf16.mxu0 %v304
    %342 = vmatpush1.bf16.msra.mxu0 %v303
    %343 = vmatprep.subr.bf16.mxu0 %v302
    %344 = vmatpush1.bf16.msra.mxu0 %v301
    %345 = vmatprep.subr.bf16.mxu0 %v300
    %346 = vmatpush1.bf16.msra.mxu0 %v299
    %347 = vmatprep.subr.bf16.mxu0 %v298
    %348 = vmatpush1.bf16.msra.mxu0 %v297
    %349 = vmatprep.subr.bf16.mxu0 %v296
    %350 = vmatpush1.bf16.msra.mxu0 %v295
    %351 = vmatprep.subr.bf16.mxu0 %v294
    %352 = vmatpush1.bf16.msra.mxu0 %v293
    %353 = vmatprep.subr.bf16.mxu0 %v292
    %354 = vmatpush1.bf16.msra.mxu0 %v291
    %355 = vmatprep.subr.bf16.mxu0 %v290
    %356 = vmatpush1.bf16.msra.mxu0 %v289
    %357 = vmatprep.subr.bf16.mxu0 %v320
    %358 = vmatpush2.bf16.msra.mxu0 %v319
    %359 = vmatprep.subr.bf16.mxu0 %v318
    %360 = vmatpush2.bf16.msra.mxu0 %v317
    %361 = vmatprep.subr.bf16.mxu0 %v316
    %362 = vmatpush2.bf16.msra.mxu0 %v315
    %363 = vmatprep.subr.bf16.mxu0 %v314
    %364 = vmatpush2.bf16.msra.mxu0 %v313
    %365 = vmatprep.subr.bf16.mxu0 %v312
    %366 = vmatpush2.bf16.msra.mxu0 %v311
    %367 = vmatprep.subr.bf16.mxu0 %v310
    %368 = vmatpush2.bf16.msra.mxu0 %v309
    %369 = vmatprep.subr.bf16.mxu0 %v308
    %370 = vmatpush2.bf16.msra.mxu0 %v307
    %371 = vmatprep.subr.bf16.mxu0 %v306
    %372 = vmatpush2.bf16.msra.mxu0 %v305
    %373 = vmatprep.mubr.bf16.mxu0 %v334
    %374 = vmatmul.mubr.bf16.gmra.mxu0 %v333
    %v375 = vpop.f32.mrf.mxu0
    %v376 = vadd.f32 0.0, %v375
    %v377 = vpop.f32.mrf.mxu0
    %v378 = vadd.f32 0.0, %v377
    %v379 = vpop.f32.mrf.mxu0
    %v380 = vadd.f32 0.0, %v379
    %v381 = vpop.f32.mrf.mxu0
    %v382 = vadd.f32 0.0, %v381
    %383 = vmatprep.mubr.bf16.mxu0 %v336
    %384 = vmatmul.mubr.bf16.gmra.mxu0 %v335
    %v385 = vpop.f32.mrf.mxu0
    %v386 = vadd.f32 0.0, %v385
    %v387 = vpop.f32.mrf.mxu0
    %v388 = vadd.f32 0.0, %v387
    %v389 = vpop.f32.mrf.mxu0
    %v390 = vadd.f32 0.0, %v389
    %v391 = vpop.f32.mrf.mxu0
    %v392 = vadd.f32 0.0, %v391
    %393 = vdwg.mxu0
    %394 = vst [vmem:[#allocation7] sm:$0xff] %v376
    %395 = vst [vmem:[#allocation7 + $0x8] sm:$0xff] %v378
    %396 = vst [vmem:[#allocation7 + $0x10] sm:$0xff] %v380
    %397 = vst [vmem:[#allocation7 + $0x18] sm:$0xff] %v382
    %398 = vst [vmem:[#allocation7 + $0x20] sm:$0xff] %v386
    %399 = vst [vmem:[#allocation7 + $0x28] sm:$0xff] %v388
    %400 = vst [vmem:[#allocation7 + $0x30] sm:$0xff] %v390
    %401 = vst [vmem:[#allocation7 + $0x38] sm:$0xff] %v392
    %v402 = vlaneseq
    %v403 = vshrl.u32 %v402, 7
    %v404 = vsub.s32 1, %v403
    %v405 = vrot.slane %v49, %v404
    %v406 = vlaneseq
    %v407 = vshrl.u32 %v406, 7
    %v408 = vsub.s32 1, %v407
    %v409 = vrot.slane %v51, %v408
    %vm410 = vcmp.eq.s32.totalorder %v405, %v53
    %vm411 = vcmp.eq.s32.totalorder %v409, %v53
    %vm412 = vcmp.eq.s32.totalorder %v405, %v54
    %vm413 = vcmp.eq.s32.totalorder %v409, %v54
    %vm414 = vcmp.eq.s32.totalorder %v405, %v55
    %vm415 = vcmp.eq.s32.totalorder %v409, %v55
    %vm416 = vcmp.eq.s32.totalorder %v405, %v56
    %vm417 = vcmp.eq.s32.totalorder %v409, %v56
    %vm418 = vcmp.eq.s32.totalorder %v405, %v57
    %vm419 = vcmp.eq.s32.totalorder %v409, %v57
    %vm420 = vcmp.eq.s32.totalorder %v405, %v58
    %vm421 = vcmp.eq.s32.totalorder %v409, %v58
    %vm422 = vcmp.eq.s32.totalorder %v405, %v59
    %vm423 = vcmp.eq.s32.totalorder %v409, %v59
    %vm424 = vcmp.eq.s32.totalorder %v405, %v60
    %vm425 = vcmp.eq.s32.totalorder %v409, %v60
    %vm426 = vcmp.eq.s32.totalorder %v405, %v61
    %vm427 = vcmp.eq.s32.totalorder %v409, %v61
    %vm428 = vcmp.eq.s32.totalorder %v405, %v62
    %vm429 = vcmp.eq.s32.totalorder %v409, %v62
    %vm430 = vcmp.eq.s32.totalorder %v405, %v63
    %vm431 = vcmp.eq.s32.totalorder %v409, %v63
    %vm432 = vcmp.eq.s32.totalorder %v405, %v64
    %vm433 = vcmp.eq.s32.totalorder %v409, %v64
    %vm434 = vcmp.eq.s32.totalorder %v405, %v65
    %vm435 = vcmp.eq.s32.totalorder %v409, %v65
    %vm436 = vcmp.eq.s32.totalorder %v405, %v66
    %vm437 = vcmp.eq.s32.totalorder %v409, %v66
    %vm438 = vcmp.eq.s32.totalorder %v405, %v67
    %vm439 = vcmp.eq.s32.totalorder %v409, %v67
    %vm440 = vcmp.eq.s32.totalorder %v405, %v68
    %vm441 = vcmp.eq.s32.totalorder %v409, %v68
    %vm442 = vcmp.eq.s32.totalorder %v405, %v69
    %vm443 = vcmp.eq.s32.totalorder %v409, %v69
    %vm444 = vcmp.eq.s32.totalorder %v405, %v70
    %vm445 = vcmp.eq.s32.totalorder %v409, %v70
    %vm446 = vcmp.eq.s32.totalorder %v405, %v71
    %vm447 = vcmp.eq.s32.totalorder %v409, %v71
    %vm448 = vcmp.eq.s32.totalorder %v405, %v72
    %vm449 = vcmp.eq.s32.totalorder %v409, %v72
    %vm450 = vcmp.eq.s32.totalorder %v405, %v73
    %vm451 = vcmp.eq.s32.totalorder %v409, %v73
    %vm452 = vcmp.eq.s32.totalorder %v405, %v74
    %vm453 = vcmp.eq.s32.totalorder %v409, %v74
    %vm454 = vcmp.eq.s32.totalorder %v405, %v75
    %vm455 = vcmp.eq.s32.totalorder %v409, %v75
    %vm456 = vcmp.eq.s32.totalorder %v405, %v76
    %vm457 = vcmp.eq.s32.totalorder %v409, %v76
    %vm458 = vcmp.eq.s32.totalorder %v405, %v77
    %vm459 = vcmp.eq.s32.totalorder %v409, %v77
    %vm460 = vcmp.eq.s32.totalorder %v405, %v78
    %vm461 = vcmp.eq.s32.totalorder %v409, %v78
    %vm462 = vcmp.eq.s32.totalorder %v405, %v79
    %vm463 = vcmp.eq.s32.totalorder %v409, %v79
    %vm464 = vcmp.eq.s32.totalorder %v405, %v80
    %vm465 = vcmp.eq.s32.totalorder %v409, %v80
    %vm466 = vcmp.eq.s32.totalorder %v405, %v81
    %vm467 = vcmp.eq.s32.totalorder %v409, %v81
    %vm468 = vcmp.eq.s32.totalorder %v405, %v82
    %vm469 = vcmp.eq.s32.totalorder %v409, %v82
    %vm470 = vcmp.eq.s32.totalorder %v405, %v83
    %vm471 = vcmp.eq.s32.totalorder %v409, %v83
    %vm472 = vcmp.eq.s32.totalorder %v405, %v84
    %vm473 = vcmp.eq.s32.totalorder %v409, %v84
    %v474 = vsel %vm410, 1, 0
    %v475 = vsel %vm411, 1, 0
    %v476 = vsel %vm412, 1, 0
    %v477 = vsel %vm413, 1, 0
    %v478 = vsel %vm414, 1, 0
    %v479 = vsel %vm415, 1, 0
    %v480 = vsel %vm416, 1, 0
    %v481 = vsel %vm417, 1, 0
    %v482 = vsel %vm418, 1, 0
    %v483 = vsel %vm419, 1, 0
    %v484 = vsel %vm420, 1, 0
    %v485 = vsel %vm421, 1, 0
    %v486 = vsel %vm422, 1, 0
    %v487 = vsel %vm423, 1, 0
    %v488 = vsel %vm424, 1, 0
    %v489 = vsel %vm425, 1, 0
    %v490 = vsel %vm426, 1, 0
    %v491 = vsel %vm427, 1, 0
    %v492 = vsel %vm428, 1, 0
    %v493 = vsel %vm429, 1, 0
    %v494 = vsel %vm430, 1, 0
    %v495 = vsel %vm431, 1, 0
    %v496 = vsel %vm432, 1, 0
    %v497 = vsel %vm433, 1, 0
    %v498 = vsel %vm434, 1, 0
    %v499 = vsel %vm435, 1, 0
    %v500 = vsel %vm436, 1, 0
    %v501 = vsel %vm437, 1, 0
    %v502 = vsel %vm438, 1, 0
    %v503 = vsel %vm439, 1, 0
    %v504 = vsel %vm440, 1, 0
    %v505 = vsel %vm441, 1, 0
    %v506 = vsel %vm442, 1, 0
    %v507 = vsel %vm443, 1, 0
    %v508 = vsel %vm444, 1, 0
    %v509 = vsel %vm445, 1, 0
    %v510 = vsel %vm446, 1, 0
    %v511 = vsel %vm447, 1, 0
    %v512 = vsel %vm448, 1, 0
    %v513 = vsel %vm449, 1, 0
    %v514 = vsel %vm450, 1, 0
    %v515 = vsel %vm451, 1, 0
    %v516 = vsel %vm452, 1, 0
    %v517 = vsel %vm453, 1, 0
    %v518 = vsel %vm454, 1, 0
    %v519 = vsel %vm455, 1, 0
    %v520 = vsel %vm456, 1, 0
    %v521 = vsel %vm457, 1, 0
    %v522 = vsel %vm458, 1, 0
    %v523 = vsel %vm459, 1, 0
    %v524 = vsel %vm460, 1, 0
    %v525 = vsel %vm461, 1, 0
    %v526 = vsel %vm462, 1, 0
    %v527 = vsel %vm463, 1, 0
    %v528 = vsel %vm464, 1, 0
    %v529 = vsel %vm465, 1, 0
    %v530 = vsel %vm466, 1, 0
    %v531 = vsel %vm467, 1, 0
    %v532 = vsel %vm468, 1, 0
    %v533 = vsel %vm469, 1, 0
    %v534 = vsel %vm470, 1, 0
    %v535 = vsel %vm471, 1, 0
    %v536 = vsel %vm472, 1, 0
    %v537 = vsel %vm473, 1, 0
    %v538 = vcvt.s32.f32 %v474
    %v539 = vcvt.s32.f32 %v475
    %v540 = vcvt.s32.f32 %v476
    %v541 = vcvt.s32.f32 %v477
    %v542 = vcvt.s32.f32 %v478
    %v543 = vcvt.s32.f32 %v479
    %v544 = vcvt.s32.f32 %v480
    %v545 = vcvt.s32.f32 %v481
    %v546 = vcvt.s32.f32 %v482
    %v547 = vcvt.s32.f32 %v483
    %v548 = vcvt.s32.f32 %v484
    %v549 = vcvt.s32.f32 %v485
    %v550 = vcvt.s32.f32 %v486
    %v551 = vcvt.s32.f32 %v487
    %v552 = vcvt.s32.f32 %v488
    %v553 = vcvt.s32.f32 %v489
    %v554 = vcvt.s32.f32 %v490
    %v555 = vcvt.s32.f32 %v491
    %v556 = vcvt.s32.f32 %v492
    %v557 = vcvt.s32.f32 %v493
    %v558 = vcvt.s32.f32 %v494
    %v559 = vcvt.s32.f32 %v495
    %v560 = vcvt.s32.f32 %v496
    %v561 = vcvt.s32.f32 %v497
    %v562 = vcvt.s32.f32 %v498
    %v563 = vcvt.s32.f32 %v499
    %v564 = vcvt.s32.f32 %v500
    %v565 = vcvt.s32.f32 %v501
    %v566 = vcvt.s32.f32 %v502
    %v567 = vcvt.s32.f32 %v503
    %v568 = vcvt.s32.f32 %v504
    %v569 = vcvt.s32.f32 %v505
    %v570 = vcvt.s32.f32 %v506
    %v571 = vcvt.s32.f32 %v507
    %v572 = vcvt.s32.f32 %v508
    %v573 = vcvt.s32.f32 %v509
    %v574 = vcvt.s32.f32 %v510
    %v575 = vcvt.s32.f32 %v511
    %v576 = vcvt.s32.f32 %v512
    %v577 = vcvt.s32.f32 %v513
    %v578 = vcvt.s32.f32 %v514
    %v579 = vcvt.s32.f32 %v515
    %v580 = vcvt.s32.f32 %v516
    %v581 = vcvt.s32.f32 %v517
    %v582 = vcvt.s32.f32 %v518
    %v583 = vcvt.s32.f32 %v519
    %v584 = vcvt.s32.f32 %v520
    %v585 = vcvt.s32.f32 %v521
    %v586 = vcvt.s32.f32 %v522
    %v587 = vcvt.s32.f32 %v523
    %v588 = vcvt.s32.f32 %v524
    %v589 = vcvt.s32.f32 %v525
    %v590 = vcvt.s32.f32 %v526
    %v591 = vcvt.s32.f32 %v527
    %v592 = vcvt.s32.f32 %v528
    %v593 = vcvt.s32.f32 %v529
    %v594 = vcvt.s32.f32 %v530
    %v595 = vcvt.s32.f32 %v531
    %v596 = vcvt.s32.f32 %v532
    %v597 = vcvt.s32.f32 %v533
    %v598 = vcvt.s32.f32 %v534
    %v599 = vcvt.s32.f32 %v535
    %v600 = vcvt.s32.f32 %v536
    %v601 = vcvt.s32.f32 %v537
    %v602 = vpack.c.bf16 %v540, %v538
    %v603 = vpack.c.bf16 %v541, %v539
    %v604 = vpack.c.bf16 %v544, %v542
    %v605 = vpack.c.bf16 %v545, %v543
    %v606 = vpack.c.bf16 %v548, %v546
    %v607 = vpack.c.bf16 %v549, %v547
    %v608 = vpack.c.bf16 %v552, %v550
    %v609 = vpack.c.bf16 %v553, %v551
    %v610 = vpack.c.bf16 %v556, %v554
    %v611 = vpack.c.bf16 %v557, %v555
    %v612 = vpack.c.bf16 %v560, %v558
    %v613 = vpack.c.bf16 %v561, %v559
    %v614 = vpack.c.bf16 %v564, %v562
    %v615 = vpack.c.bf16 %v565, %v563
    %v616 = vpack.c.bf16 %v568, %v566
    %v617 = vpack.c.bf16 %v569, %v567
    %v618 = vpack.c.bf16 %v572, %v570
    %v619 = vpack.c.bf16 %v573, %v571
    %v620 = vpack.c.bf16 %v576, %v574
    %v621 = vpack.c.bf16 %v577, %v575
    %v622 = vpack.c.bf16 %v580, %v578
    %v623 = vpack.c.bf16 %v581, %v579
    %v624 = vpack.c.bf16 %v584, %v582
    %v625 = vpack.c.bf16 %v585, %v583
    %v626 = vpack.c.bf16 %v588, %v586
    %v627 = vpack.c.bf16 %v589, %v587
    %v628 = vpack.c.bf16 %v592, %v590
    %v629 = vpack.c.bf16 %v593, %v591
    %v630 = vpack.c.bf16 %v596, %v594
    %v631 = vpack.c.bf16 %v597, %v595
    %v632 = vpack.c.bf16 %v600, %v598
    %v633 = vpack.c.bf16 %v601, %v599
    %634 = vmatprep.subr.bf16.mxu0 %v617
    %635 = vmatpush1.bf16.msra.mxu0 %v616
    %636 = vmatprep.subr.bf16.mxu0 %v615
    %637 = vmatpush1.bf16.msra.mxu0 %v614
    %638 = vmatprep.subr.bf16.mxu0 %v613
    %639 = vmatpush1.bf16.msra.mxu0 %v612
    %640 = vmatprep.subr.bf16.mxu0 %v611
    %641 = vmatpush1.bf16.msra.mxu0 %v610
    %642 = vmatprep.subr.bf16.mxu0 %v609
    %643 = vmatpush1.bf16.msra.mxu0 %v608
    %644 = vmatprep.subr.bf16.mxu0 %v607
    %645 = vmatpush1.bf16.msra.mxu0 %v606
    %646 = vmatprep.subr.bf16.mxu0 %v605
    %647 = vmatpush1.bf16.msra.mxu0 %v604
    %648 = vmatprep.subr.bf16.mxu0 %v603
    %649 = vmatpush1.bf16.msra.mxu0 %v602
    %650 = vmatprep.subr.bf16.mxu0 %v633
    %651 = vmatpush2.bf16.msra.mxu0 %v632
    %652 = vmatprep.subr.bf16.mxu0 %v631
    %653 = vmatpush2.bf16.msra.mxu0 %v630
    %654 = vmatprep.subr.bf16.mxu0 %v629
    %655 = vmatpush2.bf16.msra.mxu0 %v628
    %656 = vmatprep.subr.bf16.mxu0 %v627
    %657 = vmatpush2.bf16.msra.mxu0 %v626
    %658 = vmatprep.subr.bf16.mxu0 %v625
    %659 = vmatpush2.bf16.msra.mxu0 %v624
    %660 = vmatprep.subr.bf16.mxu0 %v623
    %661 = vmatpush2.bf16.msra.mxu0 %v622
    %662 = vmatprep.subr.bf16.mxu0 %v621
    %663 = vmatpush2.bf16.msra.mxu0 %v620
    %664 = vmatprep.subr.bf16.mxu0 %v619
    %665 = vmatpush2.bf16.msra.mxu0 %v618
    %666 = vmatprep.mubr.bf16.mxu0 %v334
    %667 = vmatmul.mubr.bf16.gmra.mxu0 %v333
    %v668 = vpop.f32.mrf.mxu0
    %v669 = vadd.f32 0.0, %v668
    %v670 = vpop.f32.mrf.mxu0
    %v671 = vadd.f32 0.0, %v670
    %v672 = vpop.f32.mrf.mxu0
    %v673 = vadd.f32 0.0, %v672
    %v674 = vpop.f32.mrf.mxu0
    %v675 = vadd.f32 0.0, %v674
    %676 = vmatprep.mubr.bf16.mxu0 %v336
    %677 = vmatmul.mubr.bf16.gmra.mxu0 %v335
    %v678 = vpop.f32.mrf.mxu0
    %v679 = vadd.f32 0.0, %v678
    %v680 = vpop.f32.mrf.mxu0
    %v681 = vadd.f32 0.0, %v680
    %v682 = vpop.f32.mrf.mxu0
    %v683 = vadd.f32 0.0, %v682
    %v684 = vpop.f32.mrf.mxu0
    %v685 = vadd.f32 0.0, %v684
    %686 = vdwg.mxu0
    %s687 = scalar_lea.vmem [#allocation7], 64
    %688 = vst [vmem:[%s687] sm:$0xff] %v669
    %689 = vst [vmem:[%s687 + $0x8] sm:$0xff] %v671
    %690 = vst [vmem:[%s687 + $0x10] sm:$0xff] %v673
    %691 = vst [vmem:[%s687 + $0x18] sm:$0xff] %v675
    %692 = vst [vmem:[%s687 + $0x20] sm:$0xff] %v679
    %693 = vst [vmem:[%s687 + $0x28] sm:$0xff] %v681
    %694 = vst [vmem:[%s687 + $0x30] sm:$0xff] %v683
    %695 = vst [vmem:[%s687 + $0x38] sm:$0xff] %v685
    %v696 = vlaneseq
    %v697 = vshrl.u32 %v696, 7
    %v698 = vsub.s32 2, %v697
    %v699 = vrot.slane %v49, %v698
    %v700 = vlaneseq
    %v701 = vshrl.u32 %v700, 7
    %v702 = vsub.s32 2, %v701
    %v703 = vrot.slane %v51, %v702
    %vm704 = vcmp.eq.s32.totalorder %v699, %v53
    %vm705 = vcmp.eq.s32.totalorder %v703, %v53
    %vm706 = vcmp.eq.s32.totalorder %v699, %v54
    %vm707 = vcmp.eq.s32.totalorder %v703, %v54
    %vm708 = vcmp.eq.s32.totalorder %v699, %v55
    %vm709 = vcmp.eq.s32.totalorder %v703, %v55
    %vm710 = vcmp.eq.s32.totalorder %v699, %v56
    %vm711 = vcmp.eq.s32.totalorder %v703, %v56
    %vm712 = vcmp.eq.s32.totalorder %v699, %v57
    %vm713 = vcmp.eq.s32.totalorder %v703, %v57
    %vm714 = vcmp.eq.s32.totalorder %v699, %v58
    %vm715 = vcmp.eq.s32.totalorder %v703, %v58
    %vm716 = vcmp.eq.s32.totalorder %v699, %v59
    %vm717 = vcmp.eq.s32.totalorder %v703, %v59
    %vm718 = vcmp.eq.s32.totalorder %v699, %v60
    %vm719 = vcmp.eq.s32.totalorder %v703, %v60
    %vm720 = vcmp.eq.s32.totalorder %v699, %v61
    %vm721 = vcmp.eq.s32.totalorder %v703, %v61
    %vm722 = vcmp.eq.s32.totalorder %v699, %v62
    %vm723 = vcmp.eq.s32.totalorder %v703, %v62
    %vm724 = vcmp.eq.s32.totalorder %v699, %v63
    %vm725 = vcmp.eq.s32.totalorder %v703, %v63
    %vm726 = vcmp.eq.s32.totalorder %v699, %v64
    %vm727 = vcmp.eq.s32.totalorder %v703, %v64
    %vm728 = vcmp.eq.s32.totalorder %v699, %v65
    %vm729 = vcmp.eq.s32.totalorder %v703, %v65
    %vm730 = vcmp.eq.s32.totalorder %v699, %v66
    %vm731 = vcmp.eq.s32.totalorder %v703, %v66
    %vm732 = vcmp.eq.s32.totalorder %v699, %v67
    %vm733 = vcmp.eq.s32.totalorder %v703, %v67
    %vm734 = vcmp.eq.s32.totalorder %v699, %v68
    %vm735 = vcmp.eq.s32.totalorder %v703, %v68
    %vm736 = vcmp.eq.s32.totalorder %v699, %v69
    %vm737 = vcmp.eq.s32.totalorder %v703, %v69
    %vm738 = vcmp.eq.s32.totalorder %v699, %v70
    %vm739 = vcmp.eq.s32.totalorder %v703, %v70
    %vm740 = vcmp.eq.s32.totalorder %v699, %v71
    %vm741 = vcmp.eq.s32.totalorder %v703, %v71
    %vm742 = vcmp.eq.s32.totalorder %v699, %v72
    %vm743 = vcmp.eq.s32.totalorder %v703, %v72
    %vm744 = vcmp.eq.s32.totalorder %v699, %v73
    %vm745 = vcmp.eq.s32.totalorder %v703, %v73
    %vm746 = vcmp.eq.s32.totalorder %v699, %v74
    %vm747 = vcmp.eq.s32.totalorder %v703, %v74
    %vm748 = vcmp.eq.s32.totalorder %v699, %v75
    %vm749 = vcmp.eq.s32.totalorder %v703, %v75
    %vm750 = vcmp.eq.s32.totalorder %v699, %v76
    %vm751 = vcmp.eq.s32.totalorder %v703, %v76
    %vm752 = vcmp.eq.s32.totalorder %v699, %v77
    %vm753 = vcmp.eq.s32.totalorder %v703, %v77
    %vm754 = vcmp.eq.s32.totalorder %v699, %v78
    %vm755 = vcmp.eq.s32.totalorder %v703, %v78
    %vm756 = vcmp.eq.s32.totalorder %v699, %v79
    %vm757 = vcmp.eq.s32.totalorder %v703, %v79
    %vm758 = vcmp.eq.s32.totalorder %v699, %v80
    %vm759 = vcmp.eq.s32.totalorder %v703, %v80
    %vm760 = vcmp.eq.s32.totalorder %v699, %v81
    %vm761 = vcmp.eq.s32.totalorder %v703, %v81
    %vm762 = vcmp.eq.s32.totalorder %v699, %v82
    %vm763 = vcmp.eq.s32.totalorder %v703, %v82
    %vm764 = vcmp.eq.s32.totalorder %v699, %v83
    %vm765 = vcmp.eq.s32.totalorder %v703, %v83
    %vm766 = vcmp.eq.s32.totalorder %v699, %v84
    %vm767 = vcmp.eq.s32.totalorder %v703, %v84
    %v768 = vsel %vm704, 1, 0
    %v769 = vsel %vm705, 1, 0
    %v770 = vsel %vm706, 1, 0
    %v771 = vsel %vm707, 1, 0
    %v772 = vsel %vm708, 1, 0
    %v773 = vsel %vm709, 1, 0
    %v774 = vsel %vm710, 1, 0
    %v775 = vsel %vm711, 1, 0
    %v776 = vsel %vm712, 1, 0
    %v777 = vsel %vm713, 1, 0
    %v778 = vsel %vm714, 1, 0
    %v779 = vsel %vm715, 1, 0
    %v780 = vsel %vm716, 1, 0
    %v781 = vsel %vm717, 1, 0
    %v782 = vsel %vm718, 1, 0
    %v783 = vsel %vm719, 1, 0
    %v784 = vsel %vm720, 1, 0
    %v785 = vsel %vm721, 1, 0
    %v786 = vsel %vm722, 1, 0
    %v787 = vsel %vm723, 1, 0
    %v788 = vsel %vm724, 1, 0
    %v789 = vsel %vm725, 1, 0
    %v790 = vsel %vm726, 1, 0
    %v791 = vsel %vm727, 1, 0
    %v792 = vsel %vm728, 1, 0
    %v793 = vsel %vm729, 1, 0
    %v794 = vsel %vm730, 1, 0
    %v795 = vsel %vm731, 1, 0
    %v796 = vsel %vm732, 1, 0
    %v797 = vsel %vm733, 1, 0
    %v798 = vsel %vm734, 1, 0
    %v799 = vsel %vm735, 1, 0
    %v800 = vsel %vm736, 1, 0
    %v801 = vsel %vm737, 1, 0
    %v802 = vsel %vm738, 1, 0
    %v803 = vsel %vm739, 1, 0
    %v804 = vsel %vm740, 1, 0
    %v805 = vsel %vm741, 1, 0
    %v806 = vsel %vm742, 1, 0
    %v807 = vsel %vm743, 1, 0
    %v808 = vsel %vm744, 1, 0
    %v809 = vsel %vm745, 1, 0
    %v810 = vsel %vm746, 1, 0
    %v811 = vsel %vm747, 1, 0
    %v812 = vsel %vm748, 1, 0
    %v813 = vsel %vm749, 1, 0
    %v814 = vsel %vm750, 1, 0
    %v815 = vsel %vm751, 1, 0
    %v816 = vsel %vm752, 1, 0
    %v817 = vsel %vm753, 1, 0
    %v818 = vsel %vm754, 1, 0
    %v819 = vsel %vm755, 1, 0
    %v820 = vsel %vm756, 1, 0
    %v821 = vsel %vm757, 1, 0
    %v822 = vsel %vm758, 1, 0
    %v823 = vsel %vm759, 1, 0
    %v824 = vsel %vm760, 1, 0
    %v825 = vsel %vm761, 1, 0
    %v826 = vsel %vm762, 1, 0
    %v827 = vsel %vm763, 1, 0
    %v828 = vsel %vm764, 1, 0
    %v829 = vsel %vm765, 1, 0
    %v830 = vsel %vm766, 1, 0
    %v831 = vsel %vm767, 1, 0
    %v832 = vcvt.s32.f32 %v768
    %v833 = vcvt.s32.f32 %v769
    %v834 = vcvt.s32.f32 %v770
    %v835 = vcvt.s32.f32 %v771
    %v836 = vcvt.s32.f32 %v772
    %v837 = vcvt.s32.f32 %v773
    %v838 = vcvt.s32.f32 %v774
    %v839 = vcvt.s32.f32 %v775
    %v840 = vcvt.s32.f32 %v776
    %v841 = vcvt.s32.f32 %v777
    %v842 = vcvt.s32.f32 %v778
    %v843 = vcvt.s32.f32 %v779
    %v844 = vcvt.s32.f32 %v780
    %v845 = vcvt.s32.f32 %v781
    %v846 = vcvt.s32.f32 %v782
    %v847 = vcvt.s32.f32 %v783
    %v848 = vcvt.s32.f32 %v784
    %v849 = vcvt.s32.f32 %v785
    %v850 = vcvt.s32.f32 %v786
    %v851 = vcvt.s32.f32 %v787
    %v852 = vcvt.s32.f32 %v788
    %v853 = vcvt.s32.f32 %v789
    %v854 = vcvt.s32.f32 %v790
    %v855 = vcvt.s32.f32 %v791
    %v856 = vcvt.s32.f32 %v792
    %v857 = vcvt.s32.f32 %v793
    %v858 = vcvt.s32.f32 %v794
    %v859 = vcvt.s32.f32 %v795
    %v860 = vcvt.s32.f32 %v796
    %v861 = vcvt.s32.f32 %v797
    %v862 = vcvt.s32.f32 %v798
    %v863 = vcvt.s32.f32 %v799
    %v864 = vcvt.s32.f32 %v800
    %v865 = vcvt.s32.f32 %v801
    %v866 = vcvt.s32.f32 %v802
    %v867 = vcvt.s32.f32 %v803
    %v868 = vcvt.s32.f32 %v804
    %v869 = vcvt.s32.f32 %v805
    %v870 = vcvt.s32.f32 %v806
    %v871 = vcvt.s32.f32 %v807
    %v872 = vcvt.s32.f32 %v808
    %v873 = vcvt.s32.f32 %v809
    %v874 = vcvt.s32.f32 %v810
    %v875 = vcvt.s32.f32 %v811
    %v876 = vcvt.s32.f32 %v812
    %v877 = vcvt.s32.f32 %v813
    %v878 = vcvt.s32.f32 %v814
    %v879 = vcvt.s32.f32 %v815
    %v880 = vcvt.s32.f32 %v816
    %v881 = vcvt.s32.f32 %v817
    %v882 = vcvt.s32.f32 %v818
    %v883 = vcvt.s32.f32 %v819
    %v884 = vcvt.s32.f32 %v820
    %v885 = vcvt.s32.f32 %v821
    %v886 = vcvt.s32.f32 %v822
    %v887 = vcvt.s32.f32 %v823
    %v888 = vcvt.s32.f32 %v824
    %v889 = vcvt.s32.f32 %v825
    %v890 = vcvt.s32.f32 %v826
    %v891 = vcvt.s32.f32 %v827
    %v892 = vcvt.s32.f32 %v828
    %v893 = vcvt.s32.f32 %v829
    %v894 = vcvt.s32.f32 %v830
    %v895 = vcvt.s32.f32 %v831
    %v896 = vpack.c.bf16 %v834, %v832
    %v897 = vpack.c.bf16 %v835, %v833
    %v898 = vpack.c.bf16 %v838, %v836
    %v899 = vpack.c.bf16 %v839, %v837
    %v900 = vpack.c.bf16 %v842, %v840
    %v901 = vpack.c.bf16 %v843, %v841
    %v902 = vpack.c.bf16 %v846, %v844
    %v903 = vpack.c.bf16 %v847, %v845
    %v904 = vpack.c.bf16 %v850, %v848
    %v905 = vpack.c.bf16 %v851, %v849
    %v906 = vpack.c.bf16 %v854, %v852
    %v907 = vpack.c.bf16 %v855, %v853
    %v908 = vpack.c.bf16 %v858, %v856
    %v909 = vpack.c.bf16 %v859, %v857
    %v910 = vpack.c.bf16 %v862, %v860
    %v911 = vpack.c.bf16 %v863, %v861
    %v912 = vpack.c.bf16 %v866, %v864
    %v913 = vpack.c.bf16 %v867, %v865
    %v914 = vpack.c.bf16 %v870, %v868
    %v915 = vpack.c.bf16 %v871, %v869
    %v916 = vpack.c.bf16 %v874, %v872
    %v917 = vpack.c.bf16 %v875, %v873
    %v918 = vpack.c.bf16 %v878, %v876
    %v919 = vpack.c.bf16 %v879, %v877
    %v920 = vpack.c.bf16 %v882, %v880
    %v921 = vpack.c.bf16 %v883, %v881
    %v922 = vpack.c.bf16 %v886, %v884
    %v923 = vpack.c.bf16 %v887, %v885
    %v924 = vpack.c.bf16 %v890, %v888
    %v925 = vpack.c.bf16 %v891, %v889
    %v926 = vpack.c.bf16 %v894, %v892
    %v927 = vpack.c.bf16 %v895, %v893
    %928 = vmatprep.subr.bf16.mxu0 %v911
    %929 = vmatpush1.bf16.msra.mxu0 %v910
    %930 = vmatprep.subr.bf16.mxu0 %v909
    %931 = vmatpush1.bf16.msra.mxu0 %v908
    %932 = vmatprep.subr.bf16.mxu0 %v907
    %933 = vmatpush1.bf16.msra.mxu0 %v906
    %934 = vmatprep.subr.bf16.mxu0 %v905
    %935 = vmatpush1.bf16.msra.mxu0 %v904
    %936 = vmatprep.subr.bf16.mxu0 %v903
    %937 = vmatpush1.bf16.msra.mxu0 %v902
    %938 = vmatprep.subr.bf16.mxu0 %v901
    %939 = vmatpush1.bf16.msra.mxu0 %v900
    %940 = vmatprep.subr.bf16.mxu0 %v899
    %941 = vmatpush1.bf16.msra.mxu0 %v898
    %942 = vmatprep.subr.bf16.mxu0 %v897
    %943 = vmatpush1.bf16.msra.mxu0 %v896
    %944 = vmatprep.subr.bf16.mxu0 %v927
    %945 = vmatpush2.bf16.msra.mxu0 %v926
    %946 = vmatprep.subr.bf16.mxu0 %v925
    %947 = vmatpush2.bf16.msra.mxu0 %v924
    %948 = vmatprep.subr.bf16.mxu0 %v923
    %949 = vmatpush2.bf16.msra.mxu0 %v922
    %950 = vmatprep.subr.bf16.mxu0 %v921
    %951 = vmatpush2.bf16.msra.mxu0 %v920
    %952 = vmatprep.subr.bf16.mxu0 %v919
    %953 = vmatpush2.bf16.msra.mxu0 %v918
    %954 = vmatprep.subr.bf16.mxu0 %v917
    %955 = vmatpush2.bf16.msra.mxu0 %v916
    %956 = vmatprep.subr.bf16.mxu0 %v915
    %957 = vmatpush2.bf16.msra.mxu0 %v914
    %958 = vmatprep.subr.bf16.mxu0 %v913
    %959 = vmatpush2.bf16.msra.mxu0 %v912
    %960 = vmatprep.mubr.bf16.mxu0 %v334
    %961 = vmatmul.mubr.bf16.gmra.mxu0 %v333
    %v962 = vpop.f32.mrf.mxu0
    %v963 = vadd.f32 0.0, %v962
    %v964 = vpop.f32.mrf.mxu0
    %v965 = vadd.f32 0.0, %v964
    %v966 = vpop.f32.mrf.mxu0
    %v967 = vadd.f32 0.0, %v966
    %v968 = vpop.f32.mrf.mxu0
    %v969 = vadd.f32 0.0, %v968
    %970 = vmatprep.mubr.bf16.mxu0 %v336
    %971 = vmatmul.mubr.bf16.gmra.mxu0 %v335
    %v972 = vpop.f32.mrf.mxu0
    %v973 = vadd.f32 0.0, %v972
    %v974 = vpop.f32.mrf.mxu0
    %v975 = vadd.f32 0.0, %v974
    %v976 = vpop.f32.mrf.mxu0
    %v977 = vadd.f32 0.0, %v976
    %v978 = vpop.f32.mrf.mxu0
    %v979 = vadd.f32 0.0, %v978
    %980 = vdwg.mxu0
    %s981 = scalar_lea.vmem [#allocation7], 128
    %982 = vst [vmem:[%s981] sm:$0xff] %v963
    %983 = vst [vmem:[%s981 + $0x8] sm:$0xff] %v965
    %984 = vst [vmem:[%s981 + $0x10] sm:$0xff] %v967
    %985 = vst [vmem:[%s981 + $0x18] sm:$0xff] %v969
    %986 = vst [vmem:[%s981 + $0x20] sm:$0xff] %v973
    %987 = vst [vmem:[%s981 + $0x28] sm:$0xff] %v975
    %988 = vst [vmem:[%s981 + $0x30] sm:$0xff] %v977
    %989 = vst [vmem:[%s981 + $0x38] sm:$0xff] %v979
    %v990 = vlaneseq
    %v991 = vshrl.u32 %v990, 7
    %v992 = vsub.s32 3, %v991
    %v993 = vrot.slane %v49, %v992
    %v994 = vlaneseq
    %v995 = vshrl.u32 %v994, 7
    %v996 = vsub.s32 3, %v995
    %v997 = vrot.slane %v51, %v996
    %vm998 = vcmp.eq.s32.totalorder %v993, %v53
    %vm999 = vcmp.eq.s32.totalorder %v997, %v53
    %vm1000 = vcmp.eq.s32.totalorder %v993, %v54
    %vm1001 = vcmp.eq.s32.totalorder %v997, %v54
    %vm1002 = vcmp.eq.s32.totalorder %v993, %v55
    %vm1003 = vcmp.eq.s32.totalorder %v997, %v55
    %vm1004 = vcmp.eq.s32.totalorder %v993, %v56
    %vm1005 = vcmp.eq.s32.totalorder %v997, %v56
    %vm1006 = vcmp.eq.s32.totalorder %v993, %v57
    %vm1007 = vcmp.eq.s32.totalorder %v997, %v57
    %vm1008 = vcmp.eq.s32.totalorder %v993, %v58
    %vm1009 = vcmp.eq.s32.totalorder %v997, %v58
    %vm1010 = vcmp.eq.s32.totalorder %v993, %v59
    %vm1011 = vcmp.eq.s32.totalorder %v997, %v59
    %vm1012 = vcmp.eq.s32.totalorder %v993, %v60
    %vm1013 = vcmp.eq.s32.totalorder %v997, %v60
    %vm1014 = vcmp.eq.s32.totalorder %v993, %v61
    %vm1015 = vcmp.eq.s32.totalorder %v997, %v61
    %vm1016 = vcmp.eq.s32.totalorder %v993, %v62
    %vm1017 = vcmp.eq.s32.totalorder %v997, %v62
    %vm1018 = vcmp.eq.s32.totalorder %v993, %v63
    %vm1019 = vcmp.eq.s32.totalorder %v997, %v63
    %vm1020 = vcmp.eq.s32.totalorder %v993, %v64
    %vm1021 = vcmp.eq.s32.totalorder %v997, %v64
    %vm1022 = vcmp.eq.s32.totalorder %v993, %v65
    %vm1023 = vcmp.eq.s32.totalorder %v997, %v65
    %vm1024 = vcmp.eq.s32.totalorder %v993, %v66
    %vm1025 = vcmp.eq.s32.totalorder %v997, %v66
    %vm1026 = vcmp.eq.s32.totalorder %v993, %v67
    %vm1027 = vcmp.eq.s32.totalorder %v997, %v67
    %vm1028 = vcmp.eq.s32.totalorder %v993, %v68
    %vm1029 = vcmp.eq.s32.totalorder %v997, %v68
    %vm1030 = vcmp.eq.s32.totalorder %v993, %v69
    %vm1031 = vcmp.eq.s32.totalorder %v997, %v69
    %vm1032 = vcmp.eq.s32.totalorder %v993, %v70
    %vm1033 = vcmp.eq.s32.totalorder %v997, %v70
    %vm1034 = vcmp.eq.s32.totalorder %v993, %v71
    %vm1035 = vcmp.eq.s32.totalorder %v997, %v71
    %vm1036 = vcmp.eq.s32.totalorder %v993, %v72
    %vm1037 = vcmp.eq.s32.totalorder %v997, %v72
    %vm1038 = vcmp.eq.s32.totalorder %v993, %v73
    %vm1039 = vcmp.eq.s32.totalorder %v997, %v73
    %vm1040 = vcmp.eq.s32.totalorder %v993, %v74
    %vm1041 = vcmp.eq.s32.totalorder %v997, %v74
    %vm1042 = vcmp.eq.s32.totalorder %v993, %v75
    %vm1043 = vcmp.eq.s32.totalorder %v997, %v75
    %vm1044 = vcmp.eq.s32.totalorder %v993, %v76
    %vm1045 = vcmp.eq.s32.totalorder %v997, %v76
    %vm1046 = vcmp.eq.s32.totalorder %v993, %v77
    %vm1047 = vcmp.eq.s32.totalorder %v997, %v77
    %vm1048 = vcmp.eq.s32.totalorder %v993, %v78
    %vm1049 = vcmp.eq.s32.totalorder %v997, %v78
    %vm1050 = vcmp.eq.s32.totalorder %v993, %v79
    %vm1051 = vcmp.eq.s32.totalorder %v997, %v79
    %vm1052 = vcmp.eq.s32.totalorder %v993, %v80
    %vm1053 = vcmp.eq.s32.totalorder %v997, %v80
    %vm1054 = vcmp.eq.s32.totalorder %v993, %v81
    %vm1055 = vcmp.eq.s32.totalorder %v997, %v81
    %vm1056 = vcmp.eq.s32.totalorder %v993, %v82
    %vm1057 = vcmp.eq.s32.totalorder %v997, %v82
    %vm1058 = vcmp.eq.s32.totalorder %v993, %v83
    %vm1059 = vcmp.eq.s32.totalorder %v997, %v83
    %vm1060 = vcmp.eq.s32.totalorder %v993, %v84
    %vm1061 = vcmp.eq.s32.totalorder %v997, %v84
    %v1062 = vsel %vm998, 1, 0
    %v1063 = vsel %vm999, 1, 0
    %v1064 = vsel %vm1000, 1, 0
    %v1065 = vsel %vm1001, 1, 0
    %v1066 = vsel %vm1002, 1, 0
    %v1067 = vsel %vm1003, 1, 0
    %v1068 = vsel %vm1004, 1, 0
    %v1069 = vsel %vm1005, 1, 0
    %v1070 = vsel %vm1006, 1, 0
    %v1071 = vsel %vm1007, 1, 0
    %v1072 = vsel %vm1008, 1, 0
    %v1073 = vsel %vm1009, 1, 0
    %v1074 = vsel %vm1010, 1, 0
    %v1075 = vsel %vm1011, 1, 0
    %v1076 = vsel %vm1012, 1, 0
    %v1077 = vsel %vm1013, 1, 0
    %v1078 = vsel %vm1014, 1, 0
    %v1079 = vsel %vm1015, 1, 0
    %v1080 = vsel %vm1016, 1, 0
    %v1081 = vsel %vm1017, 1, 0
    %v1082 = vsel %vm1018, 1, 0
    %v1083 = vsel %vm1019, 1, 0
    %v1084 = vsel %vm1020, 1, 0
    %v1085 = vsel %vm1021, 1, 0
    %v1086 = vsel %vm1022, 1, 0
    %v1087 = vsel %vm1023, 1, 0
    %v1088 = vsel %vm1024, 1, 0
    %v1089 = vsel %vm1025, 1, 0
    %v1090 = vsel %vm1026, 1, 0
    %v1091 = vsel %vm1027, 1, 0
    %v1092 = vsel %vm1028, 1, 0
    %v1093 = vsel %vm1029, 1, 0
    %v1094 = vsel %vm1030, 1, 0
    %v1095 = vsel %vm1031, 1, 0
    %v1096 = vsel %vm1032, 1, 0
    %v1097 = vsel %vm1033, 1, 0
    %v1098 = vsel %vm1034, 1, 0
    %v1099 = vsel %vm1035, 1, 0
    %v1100 = vsel %vm1036, 1, 0
    %v1101 = vsel %vm1037, 1, 0
    %v1102 = vsel %vm1038, 1, 0
    %v1103 = vsel %vm1039, 1, 0
    %v1104 = vsel %vm1040, 1, 0
    %v1105 = vsel %vm1041, 1, 0
    %v1106 = vsel %vm1042, 1, 0
    %v1107 = vsel %vm1043, 1, 0
    %v1108 = vsel %vm1044, 1, 0
    %v1109 = vsel %vm1045, 1, 0
    %v1110 = vsel %vm1046, 1, 0
    %v1111 = vsel %vm1047, 1, 0
    %v1112 = vsel %vm1048, 1, 0
    %v1113 = vsel %vm1049, 1, 0
    %v1114 = vsel %vm1050, 1, 0
    %v1115 = vsel %vm1051, 1, 0
    %v1116 = vsel %vm1052, 1, 0
    %v1117 = vsel %vm1053, 1, 0
    %v1118 = vsel %vm1054, 1, 0
    %v1119 = vsel %vm1055, 1, 0
    %v1120 = vsel %vm1056, 1, 0
    %v1121 = vsel %vm1057, 1, 0
    %v1122 = vsel %vm1058, 1, 0
    %v1123 = vsel %vm1059, 1, 0
    %v1124 = vsel %vm1060, 1, 0
    %v1125 = vsel %vm1061, 1, 0
    %v1126 = vcvt.s32.f32 %v1062
    %v1127 = vcvt.s32.f32 %v1063
    %v1128 = vcvt.s32.f32 %v1064
    %v1129 = vcvt.s32.f32 %v1065
    %v1130 = vcvt.s32.f32 %v1066
    %v1131 = vcvt.s32.f32 %v1067
    %v1132 = vcvt.s32.f32 %v1068
    %v1133 = vcvt.s32.f32 %v1069
    %v1134 = vcvt.s32.f32 %v1070
    %v1135 = vcvt.s32.f32 %v1071
    %v1136 = vcvt.s32.f32 %v1072
    %v1137 = vcvt.s32.f32 %v1073
    %v1138 = vcvt.s32.f32 %v1074
    %v1139 = vcvt.s32.f32 %v1075
    %v1140 = vcvt.s32.f32 %v1076
    %v1141 = vcvt.s32.f32 %v1077
    %v1142 = vcvt.s32.f32 %v1078
    %v1143 = vcvt.s32.f32 %v1079
    %v1144 = vcvt.s32.f32 %v1080
    %v1145 = vcvt.s32.f32 %v1081
    %v1146 = vcvt.s32.f32 %v1082
    %v1147 = vcvt.s32.f32 %v1083
    %v1148 = vcvt.s32.f32 %v1084
    %v1149 = vcvt.s32.f32 %v1085
    %v1150 = vcvt.s32.f32 %v1086
    %v1151 = vcvt.s32.f32 %v1087
    %v1152 = vcvt.s32.f32 %v1088
    %v1153 = vcvt.s32.f32 %v1089
    %v1154 = vcvt.s32.f32 %v1090
    %v1155 = vcvt.s32.f32 %v1091
    %v1156 = vcvt.s32.f32 %v1092
    %v1157 = vcvt.s32.f32 %v1093
    %v1158 = vcvt.s32.f32 %v1094
    %v1159 = vcvt.s32.f32 %v1095
    %v1160 = vcvt.s32.f32 %v1096
    %v1161 = vcvt.s32.f32 %v1097
    %v1162 = vcvt.s32.f32 %v1098
    %v1163 = vcvt.s32.f32 %v1099
    %v1164 = vcvt.s32.f32 %v1100
    %v1165 = vcvt.s32.f32 %v1101
    %v1166 = vcvt.s32.f32 %v1102
    %v1167 = vcvt.s32.f32 %v1103
    %v1168 = vcvt.s32.f32 %v1104
    %v1169 = vcvt.s32.f32 %v1105
    %v1170 = vcvt.s32.f32 %v1106
    %v1171 = vcvt.s32.f32 %v1107
    %v1172 = vcvt.s32.f32 %v1108
    %v1173 = vcvt.s32.f32 %v1109
    %v1174 = vcvt.s32.f32 %v1110
    %v1175 = vcvt.s32.f32 %v1111
    %v1176 = vcvt.s32.f32 %v1112
    %v1177 = vcvt.s32.f32 %v1113
    %v1178 = vcvt.s32.f32 %v1114
    %v1179 = vcvt.s32.f32 %v1115
    %v1180 = vcvt.s32.f32 %v1116
    %v1181 = vcvt.s32.f32 %v1117
    %v1182 = vcvt.s32.f32 %v1118
    %v1183 = vcvt.s32.f32 %v1119
    %v1184 = vcvt.s32.f32 %v1120
    %v1185 = vcvt.s32.f32 %v1121
    %v1186 = vcvt.s32.f32 %v1122
    %v1187 = vcvt.s32.f32 %v1123
    %v1188 = vcvt.s32.f32 %v1124
    %v1189 = vcvt.s32.f32 %v1125
    %v1190 = vpack.c.bf16 %v1128, %v1126
    %v1191 = vpack.c.bf16 %v1129, %v1127
    %v1192 = vpack.c.bf16 %v1132, %v1130
    %v1193 = vpack.c.bf16 %v1133, %v1131
    %v1194 = vpack.c.bf16 %v1136, %v1134
    %v1195 = vpack.c.bf16 %v1137, %v1135
    %v1196 = vpack.c.bf16 %v1140, %v1138
    %v1197 = vpack.c.bf16 %v1141, %v1139
    %v1198 = vpack.c.bf16 %v1144, %v1142
    %v1199 = vpack.c.bf16 %v1145, %v1143
    %v1200 = vpack.c.bf16 %v1148, %v1146
    %v1201 = vpack.c.bf16 %v1149, %v1147
    %v1202 = vpack.c.bf16 %v1152, %v1150
    %v1203 = vpack.c.bf16 %v1153, %v1151
    %v1204 = vpack.c.bf16 %v1156, %v1154
    %v1205 = vpack.c.bf16 %v1157, %v1155
    %v1206 = vpack.c.bf16 %v1160, %v1158
    %v1207 = vpack.c.bf16 %v1161, %v1159
    %v1208 = vpack.c.bf16 %v1164, %v1162
    %v1209 = vpack.c.bf16 %v1165, %v1163
    %v1210 = vpack.c.bf16 %v1168, %v1166
    %v1211 = vpack.c.bf16 %v1169, %v1167
    %v1212 = vpack.c.bf16 %v1172, %v1170
    %v1213 = vpack.c.bf16 %v1173, %v1171
    %v1214 = vpack.c.bf16 %v1176, %v1174
    %v1215 = vpack.c.bf16 %v1177, %v1175
    %v1216 = vpack.c.bf16 %v1180, %v1178
    %v1217 = vpack.c.bf16 %v1181, %v1179
    %v1218 = vpack.c.bf16 %v1184, %v1182
    %v1219 = vpack.c.bf16 %v1185, %v1183
    %v1220 = vpack.c.bf16 %v1188, %v1186
    %v1221 = vpack.c.bf16 %v1189, %v1187
    %1222 = vmatprep.subr.bf16.mxu0 %v1205
    %1223 = vmatpush1.bf16.msra.mxu0 %v1204
    %1224 = vmatprep.subr.bf16.mxu0 %v1203
    %1225 = vmatpush1.bf16.msra.mxu0 %v1202
    %1226 = vmatprep.subr.bf16.mxu0 %v1201
    %1227 = vmatpush1.bf16.msra.mxu0 %v1200
    %1228 = vmatprep.subr.bf16.mxu0 %v1199
    %1229 = vmatpush1.bf16.msra.mxu0 %v1198
    %1230 = vmatprep.subr.bf16.mxu0 %v1197
    %1231 = vmatpush1.bf16.msra.mxu0 %v1196
    %1232 = vmatprep.subr.bf16.mxu0 %v1195
    %1233 = vmatpush1.bf16.msra.mxu0 %v1194
    %1234 = vmatprep.subr.bf16.mxu0 %v1193
    %1235 = vmatpush1.bf16.msra.mxu0 %v1192
    %1236 = vmatprep.subr.bf16.mxu0 %v1191
    %1237 = vmatpush1.bf16.msra.mxu0 %v1190
    %1238 = vmatprep.subr.bf16.mxu0 %v1221
    %1239 = vmatpush2.bf16.msra.mxu0 %v1220
    %1240 = vmatprep.subr.bf16.mxu0 %v1219
    %1241 = vmatpush2.bf16.msra.mxu0 %v1218
    %1242 = vmatprep.subr.bf16.mxu0 %v1217
    %1243 = vmatpush2.bf16.msra.mxu0 %v1216
    %1244 = vmatprep.subr.bf16.mxu0 %v1215
    %1245 = vmatpush2.bf16.msra.mxu0 %v1214
    %1246 = vmatprep.subr.bf16.mxu0 %v1213
    %1247 = vmatpush2.bf16.msra.mxu0 %v1212
    %1248 = vmatprep.subr.bf16.mxu0 %v1211
    %1249 = vmatpush2.bf16.msra.mxu0 %v1210
    %1250 = vmatprep.subr.bf16.mxu0 %v1209
    %1251 = vmatpush2.bf16.msra.mxu0 %v1208
    %1252 = vmatprep.subr.bf16.mxu0 %v1207
    %1253 = vmatpush2.bf16.msra.mxu0 %v1206
    %1254 = vmatprep.mubr.bf16.mxu0 %v334
    %1255 = vmatmul.mubr.bf16.gmra.mxu0 %v333
    %v1256 = vpop.f32.mrf.mxu0
    %v1257 = vadd.f32 0.0, %v1256
    %v1258 = vpop.f32.mrf.mxu0
    %v1259 = vadd.f32 0.0, %v1258
    %v1260 = vpop.f32.mrf.mxu0
    %v1261 = vadd.f32 0.0, %v1260
    %v1262 = vpop.f32.mrf.mxu0
    %v1263 = vadd.f32 0.0, %v1262
    %1264 = vmatprep.mubr.bf16.mxu0 %v336
    %1265 = vmatmul.mubr.bf16.gmra.mxu0 %v335
    %v1266 = vpop.f32.mrf.mxu0
    %v1267 = vadd.f32 0.0, %v1266
    %v1268 = vpop.f32.mrf.mxu0
    %v1269 = vadd.f32 0.0, %v1268
    %v1270 = vpop.f32.mrf.mxu0
    %v1271 = vadd.f32 0.0, %v1270
    %v1272 = vpop.f32.mrf.mxu0
    %v1273 = vadd.f32 0.0, %v1272
    %1274 = vdwg.mxu0
    %s1275 = scalar_lea.vmem [#allocation7], 192
    %1276 = vst [vmem:[%s1275] sm:$0xff] %v1257
    %1277 = vst [vmem:[%s1275 + $0x8] sm:$0xff] %v1259
    %1278 = vst [vmem:[%s1275 + $0x10] sm:$0xff] %v1261
    %1279 = vst [vmem:[%s1275 + $0x18] sm:$0xff] %v1263
    %1280 = vst [vmem:[%s1275 + $0x20] sm:$0xff] %v1267
    %1281 = vst [vmem:[%s1275 + $0x28] sm:$0xff] %v1269
    %1282 = vst [vmem:[%s1275 + $0x30] sm:$0xff] %v1271
    %1283 = vst [vmem:[%s1275 + $0x38] sm:$0xff] %v1273
    %v1284 = vlaneseq
    %v1285 = vshrl.u32 %v1284, 7
    %v1286 = vsub.s32 4, %v1285
    %v1287 = vrot.slane %v49, %v1286
    %v1288 = vlaneseq
    %v1289 = vshrl.u32 %v1288, 7
    %v1290 = vsub.s32 4, %v1289
    %v1291 = vrot.slane %v51, %v1290
    %vm1292 = vcmp.eq.s32.totalorder %v1287, %v53
    %vm1293 = vcmp.eq.s32.totalorder %v1291, %v53
    %vm1294 = vcmp.eq.s32.totalorder %v1287, %v54
    %vm1295 = vcmp.eq.s32.totalorder %v1291, %v54
    %vm1296 = vcmp.eq.s32.totalorder %v1287, %v55
    %vm1297 = vcmp.eq.s32.totalorder %v1291, %v55
    %vm1298 = vcmp.eq.s32.totalorder %v1287, %v56
    %vm1299 = vcmp.eq.s32.totalorder %v1291, %v56
    %vm1300 = vcmp.eq.s32.totalorder %v1287, %v57
    %vm1301 = vcmp.eq.s32.totalorder %v1291, %v57
    %vm1302 = vcmp.eq.s32.totalorder %v1287, %v58
    %vm1303 = vcmp.eq.s32.totalorder %v1291, %v58
    %vm1304 = vcmp.eq.s32.totalorder %v1287, %v59
    %vm1305 = vcmp.eq.s32.totalorder %v1291, %v59
    %vm1306 = vcmp.eq.s32.totalorder %v1287, %v60
    %vm1307 = vcmp.eq.s32.totalorder %v1291, %v60
    %vm1308 = vcmp.eq.s32.totalorder %v1287, %v61
    %vm1309 = vcmp.eq.s32.totalorder %v1291, %v61
    %vm1310 = vcmp.eq.s32.totalorder %v1287, %v62
    %vm1311 = vcmp.eq.s32.totalorder %v1291, %v62
    %vm1312 = vcmp.eq.s32.totalorder %v1287, %v63
    %vm1313 = vcmp.eq.s32.totalorder %v1291, %v63
    %vm1314 = vcmp.eq.s32.totalorder %v1287, %v64
    %vm1315 = vcmp.eq.s32.totalorder %v1291, %v64
    %vm1316 = vcmp.eq.s32.totalorder %v1287, %v65
    %vm1317 = vcmp.eq.s32.totalorder %v1291, %v65
    %vm1318 = vcmp.eq.s32.totalorder %v1287, %v66
    %vm1319 = vcmp.eq.s32.totalorder %v1291, %v66
    %vm1320 = vcmp.eq.s32.totalorder %v1287, %v67
    %vm1321 = vcmp.eq.s32.totalorder %v1291, %v67
    %vm1322 = vcmp.eq.s32.totalorder %v1287, %v68
    %vm1323 = vcmp.eq.s32.totalorder %v1291, %v68
    %vm1324 = vcmp.eq.s32.totalorder %v1287, %v69
    %vm1325 = vcmp.eq.s32.totalorder %v1291, %v69
    %vm1326 = vcmp.eq.s32.totalorder %v1287, %v70
    %vm1327 = vcmp.eq.s32.totalorder %v1291, %v70
    %vm1328 = vcmp.eq.s32.totalorder %v1287, %v71
    %vm1329 = vcmp.eq.s32.totalorder %v1291, %v71
    %vm1330 = vcmp.eq.s32.totalorder %v1287, %v72
    %vm1331 = vcmp.eq.s32.totalorder %v1291, %v72
    %vm1332 = vcmp.eq.s32.totalorder %v1287, %v73
    %vm1333 = vcmp.eq.s32.totalorder %v1291, %v73
    %vm1334 = vcmp.eq.s32.totalorder %v1287, %v74
    %vm1335 = vcmp.eq.s32.totalorder %v1291, %v74
    %vm1336 = vcmp.eq.s32.totalorder %v1287, %v75
    %vm1337 = vcmp.eq.s32.totalorder %v1291, %v75
    %vm1338 = vcmp.eq.s32.totalorder %v1287, %v76
    %vm1339 = vcmp.eq.s32.totalorder %v1291, %v76
    %vm1340 = vcmp.eq.s32.totalorder %v1287, %v77
    %vm1341 = vcmp.eq.s32.totalorder %v1291, %v77
    %vm1342 = vcmp.eq.s32.totalorder %v1287, %v78
    %vm1343 = vcmp.eq.s32.totalorder %v1291, %v78
    %vm1344 = vcmp.eq.s32.totalorder %v1287, %v79
    %vm1345 = vcmp.eq.s32.totalorder %v1291, %v79
    %vm1346 = vcmp.eq.s32.totalorder %v1287, %v80
    %vm1347 = vcmp.eq.s32.totalorder %v1291, %v80
    %vm1348 = vcmp.eq.s32.totalorder %v1287, %v81
    %vm1349 = vcmp.eq.s32.totalorder %v1291, %v81
    %vm1350 = vcmp.eq.s32.totalorder %v1287, %v82
    %vm1351 = vcmp.eq.s32.totalorder %v1291, %v82
    %vm1352 = vcmp.eq.s32.totalorder %v1287, %v83
    %vm1353 = vcmp.eq.s32.totalorder %v1291, %v83
    %vm1354 = vcmp.eq.s32.totalorder %v1287, %v84
    %vm1355 = vcmp.eq.s32.totalorder %v1291, %v84
    %v1356 = vsel %vm1292, 1, 0
    %v1357 = vsel %vm1293, 1, 0
    %v1358 = vsel %vm1294, 1, 0
    %v1359 = vsel %vm1295, 1, 0
    %v1360 = vsel %vm1296, 1, 0
    %v1361 = vsel %vm1297, 1, 0
    %v1362 = vsel %vm1298, 1, 0
    %v1363 = vsel %vm1299, 1, 0
    %v1364 = vsel %vm1300, 1, 0
    %v1365 = vsel %vm1301, 1, 0
    %v1366 = vsel %vm1302, 1, 0
    %v1367 = vsel %vm1303, 1, 0
    %v1368 = vsel %vm1304, 1, 0
    %v1369 = vsel %vm1305, 1, 0
    %v1370 = vsel %vm1306, 1, 0
    %v1371 = vsel %vm1307, 1, 0
    %v1372 = vsel %vm1308, 1, 0
    %v1373 = vsel %vm1309, 1, 0
    %v1374 = vsel %vm1310, 1, 0
    %v1375 = vsel %vm1311, 1, 0
    %v1376 = vsel %vm1312, 1, 0
    %v1377 = vsel %vm1313, 1, 0
    %v1378 = vsel %vm1314, 1, 0
    %v1379 = vsel %vm1315, 1, 0
    %v1380 = vsel %vm1316, 1, 0
    %v1381 = vsel %vm1317, 1, 0
    %v1382 = vsel %vm1318, 1, 0
    %v1383 = vsel %vm1319, 1, 0
    %v1384 = vsel %vm1320, 1, 0
    %v1385 = vsel %vm1321, 1, 0
    %v1386 = vsel %vm1322, 1, 0
    %v1387 = vsel %vm1323, 1, 0
    %v1388 = vsel %vm1324, 1, 0
    %v1389 = vsel %vm1325, 1, 0
    %v1390 = vsel %vm1326, 1, 0
    %v1391 = vsel %vm1327, 1, 0
    %v1392 = vsel %vm1328, 1, 0
    %v1393 = vsel %vm1329, 1, 0
    %v1394 = vsel %vm1330, 1, 0
    %v1395 = vsel %vm1331, 1, 0
    %v1396 = vsel %vm1332, 1, 0
    %v1397 = vsel %vm1333, 1, 0
    %v1398 = vsel %vm1334, 1, 0
    %v1399 = vsel %vm1335, 1, 0
    %v1400 = vsel %vm1336, 1, 0
    %v1401 = vsel %vm1337, 1, 0
    %v1402 = vsel %vm1338, 1, 0
    %v1403 = vsel %vm1339, 1, 0
    %v1404 = vsel %vm1340, 1, 0
    %v1405 = vsel %vm1341, 1, 0
    %v1406 = vsel %vm1342, 1, 0
    %v1407 = vsel %vm1343, 1, 0
    %v1408 = vsel %vm1344, 1, 0
    %v1409 = vsel %vm1345, 1, 0
    %v1410 = vsel %vm1346, 1, 0
    %v1411 = vsel %vm1347, 1, 0
    %v1412 = vsel %vm1348, 1, 0
    %v1413 = vsel %vm1349, 1, 0
    %v1414 = vsel %vm1350, 1, 0
    %v1415 = vsel %vm1351, 1, 0
    %v1416 = vsel %vm1352, 1, 0
    %v1417 = vsel %vm1353, 1, 0
    %v1418 = vsel %vm1354, 1, 0
    %v1419 = vsel %vm1355, 1, 0
    %v1420 = vcvt.s32.f32 %v1356
    %v1421 = vcvt.s32.f32 %v1357
    %v1422 = vcvt.s32.f32 %v1358
    %v1423 = vcvt.s32.f32 %v1359
    %v1424 = vcvt.s32.f32 %v1360
    %v1425 = vcvt.s32.f32 %v1361
    %v1426 = vcvt.s32.f32 %v1362
    %v1427 = vcvt.s32.f32 %v1363
    %v1428 = vcvt.s32.f32 %v1364
    %v1429 = vcvt.s32.f32 %v1365
    %v1430 = vcvt.s32.f32 %v1366
    %v1431 = vcvt.s32.f32 %v1367
    %v1432 = vcvt.s32.f32 %v1368
    %v1433 = vcvt.s32.f32 %v1369
    %v1434 = vcvt.s32.f32 %v1370
    %v1435 = vcvt.s32.f32 %v1371
    %v1436 = vcvt.s32.f32 %v1372
    %v1437 = vcvt.s32.f32 %v1373
    %v1438 = vcvt.s32.f32 %v1374
    %v1439 = vcvt.s32.f32 %v1375
    %v1440 = vcvt.s32.f32 %v1376
    %v1441 = vcvt.s32.f32 %v1377
    %v1442 = vcvt.s32.f32 %v1378
    %v1443 = vcvt.s32.f32 %v1379
    %v1444 = vcvt.s32.f32 %v1380
    %v1445 = vcvt.s32.f32 %v1381
    %v1446 = vcvt.s32.f32 %v1382
    %v1447 = vcvt.s32.f32 %v1383
    %v1448 = vcvt.s32.f32 %v1384
    %v1449 = vcvt.s32.f32 %v1385
    %v1450 = vcvt.s32.f32 %v1386
    %v1451 = vcvt.s32.f32 %v1387
    %v1452 = vcvt.s32.f32 %v1388
    %v1453 = vcvt.s32.f32 %v1389
    %v1454 = vcvt.s32.f32 %v1390
    %v1455 = vcvt.s32.f32 %v1391
    %v1456 = vcvt.s32.f32 %v1392
    %v1457 = vcvt.s32.f32 %v1393
    %v1458 = vcvt.s32.f32 %v1394
    %v1459 = vcvt.s32.f32 %v1395
    %v1460 = vcvt.s32.f32 %v1396
    %v1461 = vcvt.s32.f32 %v1397
    %v1462 = vcvt.s32.f32 %v1398
    %v1463 = vcvt.s32.f32 %v1399
    %v1464 = vcvt.s32.f32 %v1400
    %v1465 = vcvt.s32.f32 %v1401
    %v1466 = vcvt.s32.f32 %v1402
    %v1467 = vcvt.s32.f32 %v1403
    %v1468 = vcvt.s32.f32 %v1404
    %v1469 = vcvt.s32.f32 %v1405
    %v1470 = vcvt.s32.f32 %v1406
    %v1471 = vcvt.s32.f32 %v1407
    %v1472 = vcvt.s32.f32 %v1408
    %v1473 = vcvt.s32.f32 %v1409
    %v1474 = vcvt.s32.f32 %v1410
    %v1475 = vcvt.s32.f32 %v1411
    %v1476 = vcvt.s32.f32 %v1412
    %v1477 = vcvt.s32.f32 %v1413
    %v1478 = vcvt.s32.f32 %v1414
    %v1479 = vcvt.s32.f32 %v1415
    %v1480 = vcvt.s32.f32 %v1416
    %v1481 = vcvt.s32.f32 %v1417
    %v1482 = vcvt.s32.f32 %v1418
    %v1483 = vcvt.s32.f32 %v1419
    %v1484 = vpack.c.bf16 %v1422, %v1420
    %v1485 = vpack.c.bf16 %v1423, %v1421
    %v1486 = vpack.c.bf16 %v1426, %v1424
    %v1487 = vpack.c.bf16 %v1427, %v1425
    %v1488 = vpack.c.bf16 %v1430, %v1428
    %v1489 = vpack.c.bf16 %v1431, %v1429
    %v1490 = vpack.c.bf16 %v1434, %v1432
    %v1491 = vpack.c.bf16 %v1435, %v1433
    %v1492 = vpack.c.bf16 %v1438, %v1436
    %v1493 = vpack.c.bf16 %v1439, %v1437
    %v1494 = vpack.c.bf16 %v1442, %v1440
    %v1495 = vpack.c.bf16 %v1443, %v1441
    %v1496 = vpack.c.bf16 %v1446, %v1444
    %v1497 = vpack.c.bf16 %v1447, %v1445
    %v1498 = vpack.c.bf16 %v1450, %v1448
    %v1499 = vpack.c.bf16 %v1451, %v1449
    %v1500 = vpack.c.bf16 %v1454, %v1452
    %v1501 = vpack.c.bf16 %v1455, %v1453
    %v1502 = vpack.c.bf16 %v1458, %v1456
    %v1503 = vpack.c.bf16 %v1459, %v1457
    %v1504 = vpack.c.bf16 %v1462, %v1460
    %v1505 = vpack.c.bf16 %v1463, %v1461
    %v1506 = vpack.c.bf16 %v1466, %v1464
    %v1507 = vpack.c.bf16 %v1467, %v1465
    %v1508 = vpack.c.bf16 %v1470, %v1468
    %v1509 = vpack.c.bf16 %v1471, %v1469
    %v1510 = vpack.c.bf16 %v1474, %v1472
    %v1511 = vpack.c.bf16 %v1475, %v1473
    %v1512 = vpack.c.bf16 %v1478, %v1476
    %v1513 = vpack.c.bf16 %v1479, %v1477
    %v1514 = vpack.c.bf16 %v1482, %v1480
    %v1515 = vpack.c.bf16 %v1483, %v1481
    %1516 = vmatprep.subr.bf16.mxu0 %v1499
    %1517 = vmatpush1.bf16.msra.mxu0 %v1498
    %1518 = vmatprep.subr.bf16.mxu0 %v1497
    %1519 = vmatpush1.bf16.msra.mxu0 %v1496
    %1520 = vmatprep.subr.bf16.mxu0 %v1495
    %1521 = vmatpush1.bf16.msra.mxu0 %v1494
    %1522 = vmatprep.subr.bf16.mxu0 %v1493
    %1523 = vmatpush1.bf16.msra.mxu0 %v1492
    %1524 = vmatprep.subr.bf16.mxu0 %v1491
    %1525 = vmatpush1.bf16.msra.mxu0 %v1490
    %1526 = vmatprep.subr.bf16.mxu0 %v1489
    %1527 = vmatpush1.bf16.msra.mxu0 %v1488
    %1528 = vmatprep.subr.bf16.mxu0 %v1487
    %1529 = vmatpush1.bf16.msra.mxu0 %v1486
    %1530 = vmatprep.subr.bf16.mxu0 %v1485
    %1531 = vmatpush1.bf16.msra.mxu0 %v1484
    %1532 = vmatprep.subr.bf16.mxu0 %v1515
    %1533 = vmatpush2.bf16.msra.mxu0 %v1514
    %1534 = vmatprep.subr.bf16.mxu0 %v1513
    %1535 = vmatpush2.bf16.msra.mxu0 %v1512
    %1536 = vmatprep.subr.bf16.mxu0 %v1511
    %1537 = vmatpush2.bf16.msra.mxu0 %v1510
    %1538 = vmatprep.subr.bf16.mxu0 %v1509
    %1539 = vmatpush2.bf16.msra.mxu0 %v1508
    %1540 = vmatprep.subr.bf16.mxu0 %v1507
    %1541 = vmatpush2.bf16.msra.mxu0 %v1506
    %1542 = vmatprep.subr.bf16.mxu0 %v1505
    %1543 = vmatpush2.bf16.msra.mxu0 %v1504
    %1544 = vmatprep.subr.bf16.mxu0 %v1503
    %1545 = vmatpush2.bf16.msra.mxu0 %v1502
    %1546 = vmatprep.subr.bf16.mxu0 %v1501
    %1547 = vmatpush2.bf16.msra.mxu0 %v1500
    %1548 = vmatprep.mubr.bf16.mxu0 %v334
    %1549 = vmatmul.mubr.bf16.gmra.mxu0 %v333
    %v1550 = vpop.f32.mrf.mxu0
    %v1551 = vadd.f32 0.0, %v1550
    %v1552 = vpop.f32.mrf.mxu0
    %v1553 = vadd.f32 0.0, %v1552
    %v1554 = vpop.f32.mrf.mxu0
    %v1555 = vadd.f32 0.0, %v1554
    %v1556 = vpop.f32.mrf.mxu0
    %v1557 = vadd.f32 0.0, %v1556
    %1558 = vmatprep.mubr.bf16.mxu0 %v336
    %1559 = vmatmul.mubr.bf16.gmra.mxu0 %v335
    %v1560 = vpop.f32.mrf.mxu0
    %v1561 = vadd.f32 0.0, %v1560
    %v1562 = vpop.f32.mrf.mxu0
    %v1563 = vadd.f32 0.0, %v1562
    %v1564 = vpop.f32.mrf.mxu0
    %v1565 = vadd.f32 0.0, %v1564
    %v1566 = vpop.f32.mrf.mxu0
    %v1567 = vadd.f32 0.0, %v1566
    %1568 = vdwg.mxu0
    %s1569 = scalar_lea.vmem [#allocation7], 256
    %1570 = vst [vmem:[%s1569] sm:$0xff] %v1551
    %1571 = vst [vmem:[%s1569 + $0x8] sm:$0xff] %v1553
    %1572 = vst [vmem:[%s1569 + $0x10] sm:$0xff] %v1555
    %1573 = vst [vmem:[%s1569 + $0x18] sm:$0xff] %v1557
    %1574 = vst [vmem:[%s1569 + $0x20] sm:$0xff] %v1561
    %1575 = vst [vmem:[%s1569 + $0x28] sm:$0xff] %v1563
    %1576 = vst [vmem:[%s1569 + $0x30] sm:$0xff] %v1565
    %1577 = vst [vmem:[%s1569 + $0x38] sm:$0xff] %v1567
    %v1578 = vlaneseq
    %v1579 = vshrl.u32 %v1578, 7
    %v1580 = vsub.s32 5, %v1579
    %v1581 = vrot.slane %v49, %v1580
    %v1582 = vlaneseq
    %v1583 = vshrl.u32 %v1582, 7
    %v1584 = vsub.s32 5, %v1583
    %v1585 = vrot.slane %v51, %v1584
    %vm1586 = vcmp.eq.s32.totalorder %v1581, %v53
    %vm1587 = vcmp.eq.s32.totalorder %v1585, %v53
    %vm1588 = vcmp.eq.s32.totalorder %v1581, %v54
    %vm1589 = vcmp.eq.s32.totalorder %v1585, %v54
    %vm1590 = vcmp.eq.s32.totalorder %v1581, %v55
    %vm1591 = vcmp.eq.s32.totalorder %v1585, %v55
    %vm1592 = vcmp.eq.s32.totalorder %v1581, %v56
    %vm1593 = vcmp.eq.s32.totalorder %v1585, %v56
    %vm1594 = vcmp.eq.s32.totalorder %v1581, %v57
    %vm1595 = vcmp.eq.s32.totalorder %v1585, %v57
    %vm1596 = vcmp.eq.s32.totalorder %v1581, %v58
    %vm1597 = vcmp.eq.s32.totalorder %v1585, %v58
    %vm1598 = vcmp.eq.s32.totalorder %v1581, %v59
    %vm1599 = vcmp.eq.s32.totalorder %v1585, %v59
    %vm1600 = vcmp.eq.s32.totalorder %v1581, %v60
    %vm1601 = vcmp.eq.s32.totalorder %v1585, %v60
    %vm1602 = vcmp.eq.s32.totalorder %v1581, %v61
    %vm1603 = vcmp.eq.s32.totalorder %v1585, %v61
    %vm1604 = vcmp.eq.s32.totalorder %v1581, %v62
    %vm1605 = vcmp.eq.s32.totalorder %v1585, %v62
    %vm1606 = vcmp.eq.s32.totalorder %v1581, %v63
    %vm1607 = vcmp.eq.s32.totalorder %v1585, %v63
    %vm1608 = vcmp.eq.s32.totalorder %v1581, %v64
    %vm1609 = vcmp.eq.s32.totalorder %v1585, %v64
    %vm1610 = vcmp.eq.s32.totalorder %v1581, %v65
    %vm1611 = vcmp.eq.s32.totalorder %v1585, %v65
    %vm1612 = vcmp.eq.s32.totalorder %v1581, %v66
    %vm1613 = vcmp.eq.s32.totalorder %v1585, %v66
    %vm1614 = vcmp.eq.s32.totalorder %v1581, %v67
    %vm1615 = vcmp.eq.s32.totalorder %v1585, %v67
    %vm1616 = vcmp.eq.s32.totalorder %v1581, %v68
    %vm1617 = vcmp.eq.s32.totalorder %v1585, %v68
    %vm1618 = vcmp.eq.s32.totalorder %v1581, %v69
    %vm1619 = vcmp.eq.s32.totalorder %v1585, %v69
    %vm1620 = vcmp.eq.s32.totalorder %v1581, %v70
    %vm1621 = vcmp.eq.s32.totalorder %v1585, %v70
    %vm1622 = vcmp.eq.s32.totalorder %v1581, %v71
    %vm1623 = vcmp.eq.s32.totalorder %v1585, %v71
    %vm1624 = vcmp.eq.s32.totalorder %v1581, %v72
    %vm1625 = vcmp.eq.s32.totalorder %v1585, %v72
    %vm1626 = vcmp.eq.s32.totalorder %v1581, %v73
    %vm1627 = vcmp.eq.s32.totalorder %v1585, %v73
    %vm1628 = vcmp.eq.s32.totalorder %v1581, %v74
    %vm1629 = vcmp.eq.s32.totalorder %v1585, %v74
    %vm1630 = vcmp.eq.s32.totalorder %v1581, %v75
    %vm1631 = vcmp.eq.s32.totalorder %v1585, %v75
    %vm1632 = vcmp.eq.s32.totalorder %v1581, %v76
    %vm1633 = vcmp.eq.s32.totalorder %v1585, %v76
    %vm1634 = vcmp.eq.s32.totalorder %v1581, %v77
    %vm1635 = vcmp.eq.s32.totalorder %v1585, %v77
    %vm1636 = vcmp.eq.s32.totalorder %v1581, %v78
    %vm1637 = vcmp.eq.s32.totalorder %v1585, %v78
    %vm1638 = vcmp.eq.s32.totalorder %v1581, %v79
    %vm1639 = vcmp.eq.s32.totalorder %v1585, %v79
    %vm1640 = vcmp.eq.s32.totalorder %v1581, %v80
    %vm1641 = vcmp.eq.s32.totalorder %v1585, %v80
    %vm1642 = vcmp.eq.s32.totalorder %v1581, %v81
    %vm1643 = vcmp.eq.s32.totalorder %v1585, %v81
    %vm1644 = vcmp.eq.s32.totalorder %v1581, %v82
    %vm1645 = vcmp.eq.s32.totalorder %v1585, %v82
    %vm1646 = vcmp.eq.s32.totalorder %v1581, %v83
    %vm1647 = vcmp.eq.s32.totalorder %v1585, %v83
    %vm1648 = vcmp.eq.s32.totalorder %v1581, %v84
    %vm1649 = vcmp.eq.s32.totalorder %v1585, %v84
    %v1650 = vsel %vm1586, 1, 0
    %v1651 = vsel %vm1587, 1, 0
    %v1652 = vsel %vm1588, 1, 0
    %v1653 = vsel %vm1589, 1, 0
    %v1654 = vsel %vm1590, 1, 0
    %v1655 = vsel %vm1591, 1, 0
    %v1656 = vsel %vm1592, 1, 0
    %v1657 = vsel %vm1593, 1, 0
    %v1658 = vsel %vm1594, 1, 0
    %v1659 = vsel %vm1595, 1, 0
    %v1660 = vsel %vm1596, 1, 0
    %v1661 = vsel %vm1597, 1, 0
    %v1662 = vsel %vm1598, 1, 0
    %v1663 = vsel %vm1599, 1, 0
    %v1664 = vsel %vm1600, 1, 0
    %v1665 = vsel %vm1601, 1, 0
    %v1666 = vsel %vm1602, 1, 0
    %v1667 = vsel %vm1603, 1, 0
    %v1668 = vsel %vm1604, 1, 0
    %v1669 = vsel %vm1605, 1, 0
    %v1670 = vsel %vm1606, 1, 0
    %v1671 = vsel %vm1607, 1, 0
    %v1672 = vsel %vm1608, 1, 0
    %v1673 = vsel %vm1609, 1, 0
    %v1674 = vsel %vm1610, 1, 0
    %v1675 = vsel %vm1611, 1, 0
    %v1676 = vsel %vm1612, 1, 0
    %v1677 = vsel %vm1613, 1, 0
    %v1678 = vsel %vm1614, 1, 0
    %v1679 = vsel %vm1615, 1, 0
    %v1680 = vsel %vm1616, 1, 0
    %v1681 = vsel %vm1617, 1, 0
    %v1682 = vsel %vm1618, 1, 0
    %v1683 = vsel %vm1619, 1, 0
    %v1684 = vsel %vm1620, 1, 0
    %v1685 = vsel %vm1621, 1, 0
    %v1686 = vsel %vm1622, 1, 0
    %v1687 = vsel %vm1623, 1, 0
    %v1688 = vsel %vm1624, 1, 0
    %v1689 = vsel %vm1625, 1, 0
    %v1690 = vsel %vm1626, 1, 0
    %v1691 = vsel %vm1627, 1, 0
    %v1692 = vsel %vm1628, 1, 0
    %v1693 = vsel %vm1629, 1, 0
    %v1694 = vsel %vm1630, 1, 0
    %v1695 = vsel %vm1631, 1, 0
    %v1696 = vsel %vm1632, 1, 0
    %v1697 = vsel %vm1633, 1, 0
    %v1698 = vsel %vm1634, 1, 0
    %v1699 = vsel %vm1635, 1, 0
    %v1700 = vsel %vm1636, 1, 0
    %v1701 = vsel %vm1637, 1, 0
    %v1702 = vsel %vm1638, 1, 0
    %v1703 = vsel %vm1639, 1, 0
    %v1704 = vsel %vm1640, 1, 0
    %v1705 = vsel %vm1641, 1, 0
    %v1706 = vsel %vm1642, 1, 0
    %v1707 = vsel %vm1643, 1, 0
    %v1708 = vsel %vm1644, 1, 0
    %v1709 = vsel %vm1645, 1, 0
    %v1710 = vsel %vm1646, 1, 0
    %v1711 = vsel %vm1647, 1, 0
    %v1712 = vsel %vm1648, 1, 0
    %v1713 = vsel %vm1649, 1, 0
    %v1714 = vcvt.s32.f32 %v1650
    %v1715 = vcvt.s32.f32 %v1651
    %v1716 = vcvt.s32.f32 %v1652
    %v1717 = vcvt.s32.f32 %v1653
    %v1718 = vcvt.s32.f32 %v1654
    %v1719 = vcvt.s32.f32 %v1655
    %v1720 = vcvt.s32.f32 %v1656
    %v1721 = vcvt.s32.f32 %v1657
    %v1722 = vcvt.s32.f32 %v1658
    %v1723 = vcvt.s32.f32 %v1659
    %v1724 = vcvt.s32.f32 %v1660
    %v1725 = vcvt.s32.f32 %v1661
    %v1726 = vcvt.s32.f32 %v1662
    %v1727 = vcvt.s32.f32 %v1663
    %v1728 = vcvt.s32.f32 %v1664
    %v1729 = vcvt.s32.f32 %v1665
    %v1730 = vcvt.s32.f32 %v1666
    %v1731 = vcvt.s32.f32 %v1667
    %v1732 = vcvt.s32.f32 %v1668
    %v1733 = vcvt.s32.f32 %v1669
    %v1734 = vcvt.s32.f32 %v1670
    %v1735 = vcvt.s32.f32 %v1671
    %v1736 = vcvt.s32.f32 %v1672
    %v1737 = vcvt.s32.f32 %v1673
    %v1738 = vcvt.s32.f32 %v1674
    %v1739 = vcvt.s32.f32 %v1675
    %v1740 = vcvt.s32.f32 %v1676
    %v1741 = vcvt.s32.f32 %v1677
    %v1742 = vcvt.s32.f32 %v1678
    %v1743 = vcvt.s32.f32 %v1679
    %v1744 = vcvt.s32.f32 %v1680
    %v1745 = vcvt.s32.f32 %v1681
    %v1746 = vcvt.s32.f32 %v1682
    %v1747 = vcvt.s32.f32 %v1683
    %v1748 = vcvt.s32.f32 %v1684
    %v1749 = vcvt.s32.f32 %v1685
    %v1750 = vcvt.s32.f32 %v1686
    %v1751 = vcvt.s32.f32 %v1687
    %v1752 = vcvt.s32.f32 %v1688
    %v1753 = vcvt.s32.f32 %v1689
    %v1754 = vcvt.s32.f32 %v1690
    %v1755 = vcvt.s32.f32 %v1691
    %v1756 = vcvt.s32.f32 %v1692
    %v1757 = vcvt.s32.f32 %v1693
    %v1758 = vcvt.s32.f32 %v1694
    %v1759 = vcvt.s32.f32 %v1695
    %v1760 = vcvt.s32.f32 %v1696
    %v1761 = vcvt.s32.f32 %v1697
    %v1762 = vcvt.s32.f32 %v1698
    %v1763 = vcvt.s32.f32 %v1699
    %v1764 = vcvt.s32.f32 %v1700
    %v1765 = vcvt.s32.f32 %v1701
    %v1766 = vcvt.s32.f32 %v1702
    %v1767 = vcvt.s32.f32 %v1703
    %v1768 = vcvt.s32.f32 %v1704
    %v1769 = vcvt.s32.f32 %v1705
    %v1770 = vcvt.s32.f32 %v1706
    %v1771 = vcvt.s32.f32 %v1707
    %v1772 = vcvt.s32.f32 %v1708
    %v1773 = vcvt.s32.f32 %v1709
    %v1774 = vcvt.s32.f32 %v1710
    %v1775 = vcvt.s32.f32 %v1711
    %v1776 = vcvt.s32.f32 %v1712
    %v1777 = vcvt.s32.f32 %v1713
    %v1778 = vpack.c.bf16 %v1716, %v1714
    %v1779 = vpack.c.bf16 %v1717, %v1715
    %v1780 = vpack.c.bf16 %v1720, %v1718
    %v1781 = vpack.c.bf16 %v1721, %v1719
    %v1782 = vpack.c.bf16 %v1724, %v1722
    %v1783 = vpack.c.bf16 %v1725, %v1723
    %v1784 = vpack.c.bf16 %v1728, %v1726
    %v1785 = vpack.c.bf16 %v1729, %v1727
    %v1786 = vpack.c.bf16 %v1732, %v1730
    %v1787 = vpack.c.bf16 %v1733, %v1731
    %v1788 = vpack.c.bf16 %v1736, %v1734
    %v1789 = vpack.c.bf16 %v1737, %v1735
    %v1790 = vpack.c.bf16 %v1740, %v1738
    %v1791 = vpack.c.bf16 %v1741, %v1739
    %v1792 = vpack.c.bf16 %v1744, %v1742
    %v1793 = vpack.c.bf16 %v1745, %v1743
    %v1794 = vpack.c.bf16 %v1748, %v1746
    %v1795 = vpack.c.bf16 %v1749, %v1747
    %v1796 = vpack.c.bf16 %v1752, %v1750
    %v1797 = vpack.c.bf16 %v1753, %v1751
    %v1798 = vpack.c.bf16 %v1756, %v1754
    %v1799 = vpack.c.bf16 %v1757, %v1755
    %v1800 = vpack.c.bf16 %v1760, %v1758
    %v1801 = vpack.c.bf16 %v1761, %v1759
    %v1802 = vpack.c.bf16 %v1764, %v1762
    %v1803 = vpack.c.bf16 %v1765, %v1763
    %v1804 = vpack.c.bf16 %v1768, %v1766
    %v1805 = vpack.c.bf16 %v1769, %v1767
    %v1806 = vpack.c.bf16 %v1772, %v1770
    %v1807 = vpack.c.bf16 %v1773, %v1771
    %v1808 = vpack.c.bf16 %v1776, %v1774
    %v1809 = vpack.c.bf16 %v1777, %v1775
    %1810 = vmatprep.subr.bf16.mxu0 %v1793
    %1811 = vmatpush1.bf16.msra.mxu0 %v1792
    %1812 = vmatprep.subr.bf16.mxu0 %v1791
    %1813 = vmatpush1.bf16.msra.mxu0 %v1790
    %1814 = vmatprep.subr.bf16.mxu0 %v1789
    %1815 = vmatpush1.bf16.msra.mxu0 %v1788
    %1816 = vmatprep.subr.bf16.mxu0 %v1787
    %1817 = vmatpush1.bf16.msra.mxu0 %v1786
    %1818 = vmatprep.subr.bf16.mxu0 %v1785
    %1819 = vmatpush1.bf16.msra.mxu0 %v1784
    %1820 = vmatprep.subr.bf16.mxu0 %v1783
    %1821 = vmatpush1.bf16.msra.mxu0 %v1782
    %1822 = vmatprep.subr.bf16.mxu0 %v1781
    %1823 = vmatpush1.bf16.msra.mxu0 %v1780
    %1824 = vmatprep.subr.bf16.mxu0 %v1779
    %1825 = vmatpush1.bf16.msra.mxu0 %v1778
    %1826 = vmatprep.subr.bf16.mxu0 %v1809
    %1827 = vmatpush2.bf16.msra.mxu0 %v1808
    %1828 = vmatprep.subr.bf16.mxu0 %v1807
    %1829 = vmatpush2.bf16.msra.mxu0 %v1806
    %1830 = vmatprep.subr.bf16.mxu0 %v1805
    %1831 = vmatpush2.bf16.msra.mxu0 %v1804
    %1832 = vmatprep.subr.bf16.mxu0 %v1803
    %1833 = vmatpush2.bf16.msra.mxu0 %v1802
    %1834 = vmatprep.subr.bf16.mxu0 %v1801
    %1835 = vmatpush2.bf16.msra.mxu0 %v1800
    %1836 = vmatprep.subr.bf16.mxu0 %v1799
    %1837 = vmatpush2.bf16.msra.mxu0 %v1798
    %1838 = vmatprep.subr.bf16.mxu0 %v1797
    %1839 = vmatpush2.bf16.msra.mxu0 %v1796
    %1840 = vmatprep.subr.bf16.mxu0 %v1795
    %1841 = vmatpush2.bf16.msra.mxu0 %v1794
    %1842 = vmatprep.mubr.bf16.mxu0 %v334
    %1843 = vmatmul.mubr.bf16.gmra.mxu0 %v333
    %v1844 = vpop.f32.mrf.mxu0
    %v1845 = vadd.f32 0.0, %v1844
    %v1846 = vpop.f32.mrf.mxu0
    %v1847 = vadd.f32 0.0, %v1846
    %v1848 = vpop.f32.mrf.mxu0
    %v1849 = vadd.f32 0.0, %v1848
    %v1850 = vpop.f32.mrf.mxu0
    %v1851 = vadd.f32 0.0, %v1850
    %1852 = vmatprep.mubr.bf16.mxu0 %v336
    %1853 = vmatmul.mubr.bf16.gmra.mxu0 %v335
    %v1854 = vpop.f32.mrf.mxu0
    %v1855 = vadd.f32 0.0, %v1854
    %v1856 = vpop.f32.mrf.mxu0
    %v1857 = vadd.f32 0.0, %v1856
    %v1858 = vpop.f32.mrf.mxu0
    %v1859 = vadd.f32 0.0, %v1858
    %v1860 = vpop.f32.mrf.mxu0
    %v1861 = vadd.f32 0.0, %v1860
    %1862 = vdwg.mxu0
    %s1863 = scalar_lea.vmem [#allocation7], 320
    %1864 = vst [vmem:[%s1863] sm:$0xff] %v1845
    %1865 = vst [vmem:[%s1863 + $0x8] sm:$0xff] %v1847
    %1866 = vst [vmem:[%s1863 + $0x10] sm:$0xff] %v1849
    %1867 = vst [vmem:[%s1863 + $0x18] sm:$0xff] %v1851
    %1868 = vst [vmem:[%s1863 + $0x20] sm:$0xff] %v1855
    %1869 = vst [vmem:[%s1863 + $0x28] sm:$0xff] %v1857
    %1870 = vst [vmem:[%s1863 + $0x30] sm:$0xff] %v1859
    %1871 = vst [vmem:[%s1863 + $0x38] sm:$0xff] %v1861
    %v1872 = vlaneseq
    %v1873 = vshrl.u32 %v1872, 7
    %v1874 = vsub.s32 6, %v1873
    %v1875 = vrot.slane %v49, %v1874
    %v1876 = vlaneseq
    %v1877 = vshrl.u32 %v1876, 7
    %v1878 = vsub.s32 6, %v1877
    %v1879 = vrot.slane %v51, %v1878
    %vm1880 = vcmp.eq.s32.totalorder %v1875, %v53
    %vm1881 = vcmp.eq.s32.totalorder %v1879, %v53
    %vm1882 = vcmp.eq.s32.totalorder %v1875, %v54
    %vm1883 = vcmp.eq.s32.totalorder %v1879, %v54
    %vm1884 = vcmp.eq.s32.totalorder %v1875, %v55
    %vm1885 = vcmp.eq.s32.totalorder %v1879, %v55
    %vm1886 = vcmp.eq.s32.totalorder %v1875, %v56
    %vm1887 = vcmp.eq.s32.totalorder %v1879, %v56
    %vm1888 = vcmp.eq.s32.totalorder %v1875, %v57
    %vm1889 = vcmp.eq.s32.totalorder %v1879, %v57
    %vm1890 = vcmp.eq.s32.totalorder %v1875, %v58
    %vm1891 = vcmp.eq.s32.totalorder %v1879, %v58
    %vm1892 = vcmp.eq.s32.totalorder %v1875, %v59
    %vm1893 = vcmp.eq.s32.totalorder %v1879, %v59
    %vm1894 = vcmp.eq.s32.totalorder %v1875, %v60
    %vm1895 = vcmp.eq.s32.totalorder %v1879, %v60
    %vm1896 = vcmp.eq.s32.totalorder %v1875, %v61
    %vm1897 = vcmp.eq.s32.totalorder %v1879, %v61
    %vm1898 = vcmp.eq.s32.totalorder %v1875, %v62
    %vm1899 = vcmp.eq.s32.totalorder %v1879, %v62
    %vm1900 = vcmp.eq.s32.totalorder %v1875, %v63
    %vm1901 = vcmp.eq.s32.totalorder %v1879, %v63
    %vm1902 = vcmp.eq.s32.totalorder %v1875, %v64
    %vm1903 = vcmp.eq.s32.totalorder %v1879, %v64
    %vm1904 = vcmp.eq.s32.totalorder %v1875, %v65
    %vm1905 = vcmp.eq.s32.totalorder %v1879, %v65
    %vm1906 = vcmp.eq.s32.totalorder %v1875, %v66
    %vm1907 = vcmp.eq.s32.totalorder %v1879, %v66
    %vm1908 = vcmp.eq.s32.totalorder %v1875, %v67
    %vm1909 = vcmp.eq.s32.totalorder %v1879, %v67
    %vm1910 = vcmp.eq.s32.totalorder %v1875, %v68
    %vm1911 = vcmp.eq.s32.totalorder %v1879, %v68
    %vm1912 = vcmp.eq.s32.totalorder %v1875, %v69
    %vm1913 = vcmp.eq.s32.totalorder %v1879, %v69
    %vm1914 = vcmp.eq.s32.totalorder %v1875, %v70
    %vm1915 = vcmp.eq.s32.totalorder %v1879, %v70
    %vm1916 = vcmp.eq.s32.totalorder %v1875, %v71
    %vm1917 = vcmp.eq.s32.totalorder %v1879, %v71
    %vm1918 = vcmp.eq.s32.totalorder %v1875, %v72
    %vm1919 = vcmp.eq.s32.totalorder %v1879, %v72
    %vm1920 = vcmp.eq.s32.totalorder %v1875, %v73
    %vm1921 = vcmp.eq.s32.totalorder %v1879, %v73
    %vm1922 = vcmp.eq.s32.totalorder %v1875, %v74
    %vm1923 = vcmp.eq.s32.totalorder %v1879, %v74
    %vm1924 = vcmp.eq.s32.totalorder %v1875, %v75
    %vm1925 = vcmp.eq.s32.totalorder %v1879, %v75
    %vm1926 = vcmp.eq.s32.totalorder %v1875, %v76
    %vm1927 = vcmp.eq.s32.totalorder %v1879, %v76
    %vm1928 = vcmp.eq.s32.totalorder %v1875, %v77
    %vm1929 = vcmp.eq.s32.totalorder %v1879, %v77
    %vm1930 = vcmp.eq.s32.totalorder %v1875, %v78
    %vm1931 = vcmp.eq.s32.totalorder %v1879, %v78
    %vm1932 = vcmp.eq.s32.totalorder %v1875, %v79
    %vm1933 = vcmp.eq.s32.totalorder %v1879, %v79
    %vm1934 = vcmp.eq.s32.totalorder %v1875, %v80
    %vm1935 = vcmp.eq.s32.totalorder %v1879, %v80
    %vm1936 = vcmp.eq.s32.totalorder %v1875, %v81
    %vm1937 = vcmp.eq.s32.totalorder %v1879, %v81
    %vm1938 = vcmp.eq.s32.totalorder %v1875, %v82
    %vm1939 = vcmp.eq.s32.totalorder %v1879, %v82
    %vm1940 = vcmp.eq.s32.totalorder %v1875, %v83
    %vm1941 = vcmp.eq.s32.totalorder %v1879, %v83
    %vm1942 = vcmp.eq.s32.totalorder %v1875, %v84
    %vm1943 = vcmp.eq.s32.totalorder %v1879, %v84
    %v1944 = vsel %vm1880, 1, 0
    %v1945 = vsel %vm1881, 1, 0
    %v1946 = vsel %vm1882, 1, 0
    %v1947 = vsel %vm1883, 1, 0
    %v1948 = vsel %vm1884, 1, 0
    %v1949 = vsel %vm1885, 1, 0
    %v1950 = vsel %vm1886, 1, 0
    %v1951 = vsel %vm1887, 1, 0
    %v1952 = vsel %vm1888, 1, 0
    %v1953 = vsel %vm1889, 1, 0
    %v1954 = vsel %vm1890, 1, 0
    %v1955 = vsel %vm1891, 1, 0
    %v1956 = vsel %vm1892, 1, 0
    %v1957 = vsel %vm1893, 1, 0
    %v1958 = vsel %vm1894, 1, 0
    %v1959 = vsel %vm1895, 1, 0
    %v1960 = vsel %vm1896, 1, 0
    %v1961 = vsel %vm1897, 1, 0
    %v1962 = vsel %vm1898, 1, 0
    %v1963 = vsel %vm1899, 1, 0
    %v1964 = vsel %vm1900, 1, 0
    %v1965 = vsel %vm1901, 1, 0
    %v1966 = vsel %vm1902, 1, 0
    %v1967 = vsel %vm1903, 1, 0
    %v1968 = vsel %vm1904, 1, 0
    %v1969 = vsel %vm1905, 1, 0
    %v1970 = vsel %vm1906, 1, 0
    %v1971 = vsel %vm1907, 1, 0
    %v1972 = vsel %vm1908, 1, 0
    %v1973 = vsel %vm1909, 1, 0
    %v1974 = vsel %vm1910, 1, 0
    %v1975 = vsel %vm1911, 1, 0
    %v1976 = vsel %vm1912, 1, 0
    %v1977 = vsel %vm1913, 1, 0
    %v1978 = vsel %vm1914, 1, 0
    %v1979 = vsel %vm1915, 1, 0
    %v1980 = vsel %vm1916, 1, 0
    %v1981 = vsel %vm1917, 1, 0
    %v1982 = vsel %vm1918, 1, 0
    %v1983 = vsel %vm1919, 1, 0
    %v1984 = vsel %vm1920, 1, 0
    %v1985 = vsel %vm1921, 1, 0
    %v1986 = vsel %vm1922, 1, 0
    %v1987 = vsel %vm1923, 1, 0
    %v1988 = vsel %vm1924, 1, 0
    %v1989 = vsel %vm1925, 1, 0
    %v1990 = vsel %vm1926, 1, 0
    %v1991 = vsel %vm1927, 1, 0
    %v1992 = vsel %vm1928, 1, 0
    %v1993 = vsel %vm1929, 1, 0
    %v1994 = vsel %vm1930, 1, 0
    %v1995 = vsel %vm1931, 1, 0
    %v1996 = vsel %vm1932, 1, 0
    %v1997 = vsel %vm1933, 1, 0
    %v1998 = vsel %vm1934, 1, 0
    %v1999 = vsel %vm1935, 1, 0
    %v2000 = vsel %vm1936, 1, 0
    %v2001 = vsel %vm1937, 1, 0
    %v2002 = vsel %vm1938, 1, 0
    %v2003 = vsel %vm1939, 1, 0
    %v2004 = vsel %vm1940, 1, 0
    %v2005 = vsel %vm1941, 1, 0
    %v2006 = vsel %vm1942, 1, 0
    %v2007 = vsel %vm1943, 1, 0
    %v2008 = vcvt.s32.f32 %v1944
    %v2009 = vcvt.s32.f32 %v1945
    %v2010 = vcvt.s32.f32 %v1946
    %v2011 = vcvt.s32.f32 %v1947
    %v2012 = vcvt.s32.f32 %v1948
    %v2013 = vcvt.s32.f32 %v1949
    %v2014 = vcvt.s32.f32 %v1950
    %v2015 = vcvt.s32.f32 %v1951
    %v2016 = vcvt.s32.f32 %v1952
    %v2017 = vcvt.s32.f32 %v1953
    %v2018 = vcvt.s32.f32 %v1954
    %v2019 = vcvt.s32.f32 %v1955
    %v2020 = vcvt.s32.f32 %v1956
    %v2021 = vcvt.s32.f32 %v1957
    %v2022 = vcvt.s32.f32 %v1958
    %v2023 = vcvt.s32.f32 %v1959
    %v2024 = vcvt.s32.f32 %v1960
    %v2025 = vcvt.s32.f32 %v1961
    %v2026 = vcvt.s32.f32 %v1962
    %v2027 = vcvt.s32.f32 %v1963
    %v2028 = vcvt.s32.f32 %v1964
    %v2029 = vcvt.s32.f32 %v1965
    %v2030 = vcvt.s32.f32 %v1966
    %v2031 = vcvt.s32.f32 %v1967
    %v2032 = vcvt.s32.f32 %v1968
    %v2033 = vcvt.s32.f32 %v1969
    %v2034 = vcvt.s32.f32 %v1970
    %v2035 = vcvt.s32.f32 %v1971
    %v2036 = vcvt.s32.f32 %v1972
    %v2037 = vcvt.s32.f32 %v1973
    %v2038 = vcvt.s32.f32 %v1974
    %v2039 = vcvt.s32.f32 %v1975
    %v2040 = vcvt.s32.f32 %v1976
    %v2041 = vcvt.s32.f32 %v1977
    %v2042 = vcvt.s32.f32 %v1978
    %v2043 = vcvt.s32.f32 %v1979
    %v2044 = vcvt.s32.f32 %v1980
    %v2045 = vcvt.s32.f32 %v1981
    %v2046 = vcvt.s32.f32 %v1982
    %v2047 = vcvt.s32.f32 %v1983
    %v2048 = vcvt.s32.f32 %v1984
    %v2049 = vcvt.s32.f32 %v1985
    %v2050 = vcvt.s32.f32 %v1986
    %v2051 = vcvt.s32.f32 %v1987
    %v2052 = vcvt.s32.f32 %v1988
    %v2053 = vcvt.s32.f32 %v1989
    %v2054 = vcvt.s32.f32 %v1990
    %v2055 = vcvt.s32.f32 %v1991
    %v2056 = vcvt.s32.f32 %v1992
    %v2057 = vcvt.s32.f32 %v1993
    %v2058 = vcvt.s32.f32 %v1994
    %v2059 = vcvt.s32.f32 %v1995
    %v2060 = vcvt.s32.f32 %v1996
    %v2061 = vcvt.s32.f32 %v1997
    %v2062 = vcvt.s32.f32 %v1998
    %v2063 = vcvt.s32.f32 %v1999
    %v2064 = vcvt.s32.f32 %v2000
    %v2065 = vcvt.s32.f32 %v2001
    %v2066 = vcvt.s32.f32 %v2002
    %v2067 = vcvt.s32.f32 %v2003
    %v2068 = vcvt.s32.f32 %v2004
    %v2069 = vcvt.s32.f32 %v2005
    %v2070 = vcvt.s32.f32 %v2006
    %v2071 = vcvt.s32.f32 %v2007
    %v2072 = vpack.c.bf16 %v2010, %v2008
    %v2073 = vpack.c.bf16 %v2011, %v2009
    %v2074 = vpack.c.bf16 %v2014, %v2012
    %v2075 = vpack.c.bf16 %v2015, %v2013
    %v2076 = vpack.c.bf16 %v2018, %v2016
    %v2077 = vpack.c.bf16 %v2019, %v2017
    %v2078 = vpack.c.bf16 %v2022, %v2020
    %v2079 = vpack.c.bf16 %v2023, %v2021
    %v2080 = vpack.c.bf16 %v2026, %v2024
    %v2081 = vpack.c.bf16 %v2027, %v2025
    %v2082 = vpack.c.bf16 %v2030, %v2028
    %v2083 = vpack.c.bf16 %v2031, %v2029
    %v2084 = vpack.c.bf16 %v2034, %v2032
    %v2085 = vpack.c.bf16 %v2035, %v2033
    %v2086 = vpack.c.bf16 %v2038, %v2036
    %v2087 = vpack.c.bf16 %v2039, %v2037
    %v2088 = vpack.c.bf16 %v2042, %v2040
    %v2089 = vpack.c.bf16 %v2043, %v2041
    %v2090 = vpack.c.bf16 %v2046, %v2044
    %v2091 = vpack.c.bf16 %v2047, %v2045
    %v2092 = vpack.c.bf16 %v2050, %v2048
    %v2093 = vpack.c.bf16 %v2051, %v2049
    %v2094 = vpack.c.bf16 %v2054, %v2052
    %v2095 = vpack.c.bf16 %v2055, %v2053
    %v2096 = vpack.c.bf16 %v2058, %v2056
    %v2097 = vpack.c.bf16 %v2059, %v2057
    %v2098 = vpack.c.bf16 %v2062, %v2060
    %v2099 = vpack.c.bf16 %v2063, %v2061
    %v2100 = vpack.c.bf16 %v2066, %v2064
    %v2101 = vpack.c.bf16 %v2067, %v2065
    %v2102 = vpack.c.bf16 %v2070, %v2068
    %v2103 = vpack.c.bf16 %v2071, %v2069
    %2104 = vmatprep.subr.bf16.mxu0 %v2087
    %2105 = vmatpush1.bf16.msra.mxu0 %v2086
    %2106 = vmatprep.subr.bf16.mxu0 %v2085
    %2107 = vmatpush1.bf16.msra.mxu0 %v2084
    %2108 = vmatprep.subr.bf16.mxu0 %v2083
    %2109 = vmatpush1.bf16.msra.mxu0 %v2082
    %2110 = vmatprep.subr.bf16.mxu0 %v2081
    %2111 = vmatpush1.bf16.msra.mxu0 %v2080
    %2112 = vmatprep.subr.bf16.mxu0 %v2079
    %2113 = vmatpush1.bf16.msra.mxu0 %v2078
    %2114 = vmatprep.subr.bf16.mxu0 %v2077
    %2115 = vmatpush1.bf16.msra.mxu0 %v2076
    %2116 = vmatprep.subr.bf16.mxu0 %v2075
    %2117 = vmatpush1.bf16.msra.mxu0 %v2074
    %2118 = vmatprep.subr.bf16.mxu0 %v2073
    %2119 = vmatpush1.bf16.msra.mxu0 %v2072
    %2120 = vmatprep.subr.bf16.mxu0 %v2103
    %2121 = vmatpush2.bf16.msra.mxu0 %v2102
    %2122 = vmatprep.subr.bf16.mxu0 %v2101
    %2123 = vmatpush2.bf16.msra.mxu0 %v2100
    %2124 = vmatprep.subr.bf16.mxu0 %v2099
    %2125 = vmatpush2.bf16.msra.mxu0 %v2098
    %2126 = vmatprep.subr.bf16.mxu0 %v2097
    %2127 = vmatpush2.bf16.msra.mxu0 %v2096
    %2128 = vmatprep.subr.bf16.mxu0 %v2095
    %2129 = vmatpush2.bf16.msra.mxu0 %v2094
    %2130 = vmatprep.subr.bf16.mxu0 %v2093
    %2131 = vmatpush2.bf16.msra.mxu0 %v2092
    %2132 = vmatprep.subr.bf16.mxu0 %v2091
    %2133 = vmatpush2.bf16.msra.mxu0 %v2090
    %2134 = vmatprep.subr.bf16.mxu0 %v2089
    %2135 = vmatpush2.bf16.msra.mxu0 %v2088
    %2136 = vmatprep.mubr.bf16.mxu0 %v334
    %2137 = vmatmul.mubr.bf16.gmra.mxu0 %v333
    %v2138 = vpop.f32.mrf.mxu0
    %v2139 = vadd.f32 0.0, %v2138
    %v2140 = vpop.f32.mrf.mxu0
    %v2141 = vadd.f32 0.0, %v2140
    %v2142 = vpop.f32.mrf.mxu0
    %v2143 = vadd.f32 0.0, %v2142
    %v2144 = vpop.f32.mrf.mxu0
    %v2145 = vadd.f32 0.0, %v2144
    %2146 = vmatprep.mubr.bf16.mxu0 %v336
    %2147 = vmatmul.mubr.bf16.gmra.mxu0 %v335
    %v2148 = vpop.f32.mrf.mxu0
    %v2149 = vadd.f32 0.0, %v2148
    %v2150 = vpop.f32.mrf.mxu0
    %v2151 = vadd.f32 0.0, %v2150
    %v2152 = vpop.f32.mrf.mxu0
    %v2153 = vadd.f32 0.0, %v2152
    %v2154 = vpop.f32.mrf.mxu0
    %v2155 = vadd.f32 0.0, %v2154
    %2156 = vdwg.mxu0
    %s2157 = scalar_lea.vmem [#allocation7], 384
    %2158 = vst [vmem:[%s2157] sm:$0xff] %v2139
    %2159 = vst [vmem:[%s2157 + $0x8] sm:$0xff] %v2141
    %2160 = vst [vmem:[%s2157 + $0x10] sm:$0xff] %v2143
    %2161 = vst [vmem:[%s2157 + $0x18] sm:$0xff] %v2145
    %2162 = vst [vmem:[%s2157 + $0x20] sm:$0xff] %v2149
    %2163 = vst [vmem:[%s2157 + $0x28] sm:$0xff] %v2151
    %2164 = vst [vmem:[%s2157 + $0x30] sm:$0xff] %v2153
    %2165 = vst [vmem:[%s2157 + $0x38] sm:$0xff] %v2155
    %v2166 = vlaneseq
    %v2167 = vshrl.u32 %v2166, 7
    %v2168 = vsub.s32 7, %v2167
    %v2169 = vrot.slane %v49, %v2168
    %v2170 = vlaneseq
    %v2171 = vshrl.u32 %v2170, 7
    %v2172 = vsub.s32 7, %v2171
    %v2173 = vrot.slane %v51, %v2172
    %vm2174 = vcmp.eq.s32.totalorder %v2169, %v53
    %vm2175 = vcmp.eq.s32.totalorder %v2173, %v53
    %vm2176 = vcmp.eq.s32.totalorder %v2169, %v54
    %vm2177 = vcmp.eq.s32.totalorder %v2173, %v54
    %vm2178 = vcmp.eq.s32.totalorder %v2169, %v55
    %vm2179 = vcmp.eq.s32.totalorder %v2173, %v55
    %vm2180 = vcmp.eq.s32.totalorder %v2169, %v56
    %vm2181 = vcmp.eq.s32.totalorder %v2173, %v56
    %vm2182 = vcmp.eq.s32.totalorder %v2169, %v57
    %vm2183 = vcmp.eq.s32.totalorder %v2173, %v57
    %vm2184 = vcmp.eq.s32.totalorder %v2169, %v58
    %vm2185 = vcmp.eq.s32.totalorder %v2173, %v58
    %vm2186 = vcmp.eq.s32.totalorder %v2169, %v59
    %vm2187 = vcmp.eq.s32.totalorder %v2173, %v59
    %vm2188 = vcmp.eq.s32.totalorder %v2169, %v60
    %vm2189 = vcmp.eq.s32.totalorder %v2173, %v60
    %vm2190 = vcmp.eq.s32.totalorder %v2169, %v61
    %vm2191 = vcmp.eq.s32.totalorder %v2173, %v61
    %vm2192 = vcmp.eq.s32.totalorder %v2169, %v62
    %vm2193 = vcmp.eq.s32.totalorder %v2173, %v62
    %vm2194 = vcmp.eq.s32.totalorder %v2169, %v63
    %vm2195 = vcmp.eq.s32.totalorder %v2173, %v63
    %vm2196 = vcmp.eq.s32.totalorder %v2169, %v64
    %vm2197 = vcmp.eq.s32.totalorder %v2173, %v64
    %vm2198 = vcmp.eq.s32.totalorder %v2169, %v65
    %vm2199 = vcmp.eq.s32.totalorder %v2173, %v65
    %vm2200 = vcmp.eq.s32.totalorder %v2169, %v66
    %vm2201 = vcmp.eq.s32.totalorder %v2173, %v66
    %vm2202 = vcmp.eq.s32.totalorder %v2169, %v67
    %vm2203 = vcmp.eq.s32.totalorder %v2173, %v67
    %vm2204 = vcmp.eq.s32.totalorder %v2169, %v68
    %vm2205 = vcmp.eq.s32.totalorder %v2173, %v68
    %vm2206 = vcmp.eq.s32.totalorder %v2169, %v69
    %vm2207 = vcmp.eq.s32.totalorder %v2173, %v69
    %vm2208 = vcmp.eq.s32.totalorder %v2169, %v70
    %vm2209 = vcmp.eq.s32.totalorder %v2173, %v70
    %vm2210 = vcmp.eq.s32.totalorder %v2169, %v71
    %vm2211 = vcmp.eq.s32.totalorder %v2173, %v71
    %vm2212 = vcmp.eq.s32.totalorder %v2169, %v72
    %vm2213 = vcmp.eq.s32.totalorder %v2173, %v72
    %vm2214 = vcmp.eq.s32.totalorder %v2169, %v73
    %vm2215 = vcmp.eq.s32.totalorder %v2173, %v73
    %vm2216 = vcmp.eq.s32.totalorder %v2169, %v74
    %vm2217 = vcmp.eq.s32.totalorder %v2173, %v74
    %vm2218 = vcmp.eq.s32.totalorder %v2169, %v75
    %vm2219 = vcmp.eq.s32.totalorder %v2173, %v75
    %vm2220 = vcmp.eq.s32.totalorder %v2169, %v76
    %vm2221 = vcmp.eq.s32.totalorder %v2173, %v76
    %vm2222 = vcmp.eq.s32.totalorder %v2169, %v77
    %vm2223 = vcmp.eq.s32.totalorder %v2173, %v77
    %vm2224 = vcmp.eq.s32.totalorder %v2169, %v78
    %vm2225 = vcmp.eq.s32.totalorder %v2173, %v78
    %vm2226 = vcmp.eq.s32.totalorder %v2169, %v79
    %vm2227 = vcmp.eq.s32.totalorder %v2173, %v79
    %vm2228 = vcmp.eq.s32.totalorder %v2169, %v80
    %vm2229 = vcmp.eq.s32.totalorder %v2173, %v80
    %vm2230 = vcmp.eq.s32.totalorder %v2169, %v81
    %vm2231 = vcmp.eq.s32.totalorder %v2173, %v81
    %vm2232 = vcmp.eq.s32.totalorder %v2169, %v82
    %vm2233 = vcmp.eq.s32.totalorder %v2173, %v82
    %vm2234 = vcmp.eq.s32.totalorder %v2169, %v83
    %vm2235 = vcmp.eq.s32.totalorder %v2173, %v83
    %vm2236 = vcmp.eq.s32.totalorder %v2169, %v84
    %vm2237 = vcmp.eq.s32.totalorder %v2173, %v84
    %v2238 = vsel %vm2174, 1, 0
    %v2239 = vsel %vm2175, 1, 0
    %v2240 = vsel %vm2176, 1, 0
    %v2241 = vsel %vm2177, 1, 0
    %v2242 = vsel %vm2178, 1, 0
    %v2243 = vsel %vm2179, 1, 0
    %v2244 = vsel %vm2180, 1, 0
    %v2245 = vsel %vm2181, 1, 0
    %v2246 = vsel %vm2182, 1, 0
    %v2247 = vsel %vm2183, 1, 0
    %v2248 = vsel %vm2184, 1, 0
    %v2249 = vsel %vm2185, 1, 0
    %v2250 = vsel %vm2186, 1, 0
    %v2251 = vsel %vm2187, 1, 0
    %v2252 = vsel %vm2188, 1, 0
    %v2253 = vsel %vm2189, 1, 0
    %v2254 = vsel %vm2190, 1, 0
    %v2255 = vsel %vm2191, 1, 0
    %v2256 = vsel %vm2192, 1, 0
    %v2257 = vsel %vm2193, 1, 0
    %v2258 = vsel %vm2194, 1, 0
    %v2259 = vsel %vm2195, 1, 0
    %v2260 = vsel %vm2196, 1, 0
    %v2261 = vsel %vm2197, 1, 0
    %v2262 = vsel %vm2198, 1, 0
    %v2263 = vsel %vm2199, 1, 0
    %v2264 = vsel %vm2200, 1, 0
    %v2265 = vsel %vm2201, 1, 0
    %v2266 = vsel %vm2202, 1, 0
    %v2267 = vsel %vm2203, 1, 0
    %v2268 = vsel %vm2204, 1, 0
    %v2269 = vsel %vm2205, 1, 0
    %v2270 = vsel %vm2206, 1, 0
    %v2271 = vsel %vm2207, 1, 0
    %v2272 = vsel %vm2208, 1, 0
    %v2273 = vsel %vm2209, 1, 0
    %v2274 = vsel %vm2210, 1, 0
    %v2275 = vsel %vm2211, 1, 0
    %v2276 = vsel %vm2212, 1, 0
    %v2277 = vsel %vm2213, 1, 0
    %v2278 = vsel %vm2214, 1, 0
    %v2279 = vsel %vm2215, 1, 0
    %v2280 = vsel %vm2216, 1, 0
    %v2281 = vsel %vm2217, 1, 0
    %v2282 = vsel %vm2218, 1, 0
    %v2283 = vsel %vm2219, 1, 0
    %v2284 = vsel %vm2220, 1, 0
    %v2285 = vsel %vm2221, 1, 0
    %v2286 = vsel %vm2222, 1, 0
    %v2287 = vsel %vm2223, 1, 0
    %v2288 = vsel %vm2224, 1, 0
    %v2289 = vsel %vm2225, 1, 0
    %v2290 = vsel %vm2226, 1, 0
    %v2291 = vsel %vm2227, 1, 0
    %v2292 = vsel %vm2228, 1, 0
    %v2293 = vsel %vm2229, 1, 0
    %v2294 = vsel %vm2230, 1, 0
    %v2295 = vsel %vm2231, 1, 0
    %v2296 = vsel %vm2232, 1, 0
    %v2297 = vsel %vm2233, 1, 0
    %v2298 = vsel %vm2234, 1, 0
    %v2299 = vsel %vm2235, 1, 0
    %v2300 = vsel %vm2236, 1, 0
    %v2301 = vsel %vm2237, 1, 0
    %v2302 = vcvt.s32.f32 %v2238
    %v2303 = vcvt.s32.f32 %v2239
    %v2304 = vcvt.s32.f32 %v2240
    %v2305 = vcvt.s32.f32 %v2241
    %v2306 = vcvt.s32.f32 %v2242
    %v2307 = vcvt.s32.f32 %v2243
    %v2308 = vcvt.s32.f32 %v2244
    %v2309 = vcvt.s32.f32 %v2245
    %v2310 = vcvt.s32.f32 %v2246
    %v2311 = vcvt.s32.f32 %v2247
    %v2312 = vcvt.s32.f32 %v2248
    %v2313 = vcvt.s32.f32 %v2249
    %v2314 = vcvt.s32.f32 %v2250
    %v2315 = vcvt.s32.f32 %v2251
    %v2316 = vcvt.s32.f32 %v2252
    %v2317 = vcvt.s32.f32 %v2253
    %v2318 = vcvt.s32.f32 %v2254
    %v2319 = vcvt.s32.f32 %v2255
    %v2320 = vcvt.s32.f32 %v2256
    %v2321 = vcvt.s32.f32 %v2257
    %v2322 = vcvt.s32.f32 %v2258
    %v2323 = vcvt.s32.f32 %v2259
    %v2324 = vcvt.s32.f32 %v2260
    %v2325 = vcvt.s32.f32 %v2261
    %v2326 = vcvt.s32.f32 %v2262
    %v2327 = vcvt.s32.f32 %v2263
    %v2328 = vcvt.s32.f32 %v2264
    %v2329 = vcvt.s32.f32 %v2265
    %v2330 = vcvt.s32.f32 %v2266
    %v2331 = vcvt.s32.f32 %v2267
    %v2332 = vcvt.s32.f32 %v2268
    %v2333 = vcvt.s32.f32 %v2269
    %v2334 = vcvt.s32.f32 %v2270
    %v2335 = vcvt.s32.f32 %v2271
    %v2336 = vcvt.s32.f32 %v2272
    %v2337 = vcvt.s32.f32 %v2273
    %v2338 = vcvt.s32.f32 %v2274
    %v2339 = vcvt.s32.f32 %v2275
    %v2340 = vcvt.s32.f32 %v2276
    %v2341 = vcvt.s32.f32 %v2277
    %v2342 = vcvt.s32.f32 %v2278
    %v2343 = vcvt.s32.f32 %v2279
    %v2344 = vcvt.s32.f32 %v2280
    %v2345 = vcvt.s32.f32 %v2281
    %v2346 = vcvt.s32.f32 %v2282
    %v2347 = vcvt.s32.f32 %v2283
    %v2348 = vcvt.s32.f32 %v2284
    %v2349 = vcvt.s32.f32 %v2285
    %v2350 = vcvt.s32.f32 %v2286
    %v2351 = vcvt.s32.f32 %v2287
    %v2352 = vcvt.s32.f32 %v2288
    %v2353 = vcvt.s32.f32 %v2289
    %v2354 = vcvt.s32.f32 %v2290
    %v2355 = vcvt.s32.f32 %v2291
    %v2356 = vcvt.s32.f32 %v2292
    %v2357 = vcvt.s32.f32 %v2293
    %v2358 = vcvt.s32.f32 %v2294
    %v2359 = vcvt.s32.f32 %v2295
    %v2360 = vcvt.s32.f32 %v2296
    %v2361 = vcvt.s32.f32 %v2297
    %v2362 = vcvt.s32.f32 %v2298
    %v2363 = vcvt.s32.f32 %v2299
    %v2364 = vcvt.s32.f32 %v2300
    %v2365 = vcvt.s32.f32 %v2301
    %v2366 = vpack.c.bf16 %v2304, %v2302
    %v2367 = vpack.c.bf16 %v2305, %v2303
    %v2368 = vpack.c.bf16 %v2308, %v2306
    %v2369 = vpack.c.bf16 %v2309, %v2307
    %v2370 = vpack.c.bf16 %v2312, %v2310
    %v2371 = vpack.c.bf16 %v2313, %v2311
    %v2372 = vpack.c.bf16 %v2316, %v2314
    %v2373 = vpack.c.bf16 %v2317, %v2315
    %v2374 = vpack.c.bf16 %v2320, %v2318
    %v2375 = vpack.c.bf16 %v2321, %v2319
    %v2376 = vpack.c.bf16 %v2324, %v2322
    %v2377 = vpack.c.bf16 %v2325, %v2323
    %v2378 = vpack.c.bf16 %v2328, %v2326
    %v2379 = vpack.c.bf16 %v2329, %v2327
    %v2380 = vpack.c.bf16 %v2332, %v2330
    %v2381 = vpack.c.bf16 %v2333, %v2331
    %v2382 = vpack.c.bf16 %v2336, %v2334
    %v2383 = vpack.c.bf16 %v2337, %v2335
    %v2384 = vpack.c.bf16 %v2340, %v2338
    %v2385 = vpack.c.bf16 %v2341, %v2339
    %v2386 = vpack.c.bf16 %v2344, %v2342
    %v2387 = vpack.c.bf16 %v2345, %v2343
    %v2388 = vpack.c.bf16 %v2348, %v2346
    %v2389 = vpack.c.bf16 %v2349, %v2347
    %v2390 = vpack.c.bf16 %v2352, %v2350
    %v2391 = vpack.c.bf16 %v2353, %v2351
    %v2392 = vpack.c.bf16 %v2356, %v2354
    %v2393 = vpack.c.bf16 %v2357, %v2355
    %v2394 = vpack.c.bf16 %v2360, %v2358
    %v2395 = vpack.c.bf16 %v2361, %v2359
    %v2396 = vpack.c.bf16 %v2364, %v2362
    %v2397 = vpack.c.bf16 %v2365, %v2363
    %2398 = vmatprep.subr.bf16.mxu0 %v2381
    %2399 = vmatpush1.bf16.msra.mxu0 %v2380
    %2400 = vmatprep.subr.bf16.mxu0 %v2379
    %2401 = vmatpush1.bf16.msra.mxu0 %v2378
    %2402 = vmatprep.subr.bf16.mxu0 %v2377
    %2403 = vmatpush1.bf16.msra.mxu0 %v2376
    %2404 = vmatprep.subr.bf16.mxu0 %v2375
    %2405 = vmatpush1.bf16.msra.mxu0 %v2374
    %2406 = vmatprep.subr.bf16.mxu0 %v2373
    %2407 = vmatpush1.bf16.msra.mxu0 %v2372
    %2408 = vmatprep.subr.bf16.mxu0 %v2371
    %2409 = vmatpush1.bf16.msra.mxu0 %v2370
    %2410 = vmatprep.subr.bf16.mxu0 %v2369
    %2411 = vmatpush1.bf16.msra.mxu0 %v2368
    %2412 = vmatprep.subr.bf16.mxu0 %v2367
    %2413 = vmatpush1.bf16.msra.mxu0 %v2366
    %2414 = vmatprep.subr.bf16.mxu0 %v2397
    %2415 = vmatpush2.bf16.msra.mxu0 %v2396
    %2416 = vmatprep.subr.bf16.mxu0 %v2395
    %2417 = vmatpush2.bf16.msra.mxu0 %v2394
    %2418 = vmatprep.subr.bf16.mxu0 %v2393
    %2419 = vmatpush2.bf16.msra.mxu0 %v2392
    %2420 = vmatprep.subr.bf16.mxu0 %v2391
    %2421 = vmatpush2.bf16.msra.mxu0 %v2390
    %2422 = vmatprep.subr.bf16.mxu0 %v2389
    %2423 = vmatpush2.bf16.msra.mxu0 %v2388
    %2424 = vmatprep.subr.bf16.mxu0 %v2387
    %2425 = vmatpush2.bf16.msra.mxu0 %v2386
    %2426 = vmatprep.subr.bf16.mxu0 %v2385
    %2427 = vmatpush2.bf16.msra.mxu0 %v2384
    %2428 = vmatprep.subr.bf16.mxu0 %v2383
    %2429 = vmatpush2.bf16.msra.mxu0 %v2382
    %2430 = vmatprep.mubr.bf16.mxu0 %v334
    %2431 = vmatmul.mubr.bf16.gmra.mxu0 %v333
    %v2432 = vpop.f32.mrf.mxu0
    %v2433 = vadd.f32 0.0, %v2432
    %v2434 = vpop.f32.mrf.mxu0
    %v2435 = vadd.f32 0.0, %v2434
    %v2436 = vpop.f32.mrf.mxu0
    %v2437 = vadd.f32 0.0, %v2436
    %v2438 = vpop.f32.mrf.mxu0
    %v2439 = vadd.f32 0.0, %v2438
    %2440 = vmatprep.mubr.bf16.mxu0 %v336
    %2441 = vmatmul.mubr.bf16.gmra.mxu0 %v335
    %v2442 = vpop.f32.mrf.mxu0
    %v2443 = vadd.f32 0.0, %v2442
    %v2444 = vpop.f32.mrf.mxu0
    %v2445 = vadd.f32 0.0, %v2444
    %v2446 = vpop.f32.mrf.mxu0
    %v2447 = vadd.f32 0.0, %v2446
    %v2448 = vpop.f32.mrf.mxu0
    %v2449 = vadd.f32 0.0, %v2448
    %2450 = vdwg.mxu0
    %s2451 = scalar_lea.vmem [#allocation7], 448
    %2452 = vst [vmem:[%s2451] sm:$0xff] %v2433
    %2453 = vst [vmem:[%s2451 + $0x8] sm:$0xff] %v2435
    %2454 = vst [vmem:[%s2451 + $0x10] sm:$0xff] %v2437
    %2455 = vst [vmem:[%s2451 + $0x18] sm:$0xff] %v2439
    %2456 = vst [vmem:[%s2451 + $0x20] sm:$0xff] %v2443
    %2457 = vst [vmem:[%s2451 + $0x28] sm:$0xff] %v2445
    %2458 = vst [vmem:[%s2451 + $0x30] sm:$0xff] %v2447
    %2459 = vst [vmem:[%s2451 + $0x38] sm:$0xff] %v2449
    // Predicated region
    $region18: #{tpu_custom_call.1} parent=1 // pred_check
      _
    $region19: #{tpu_custom_call.1} parent=1 // pred_check_branch
      %2461 = sbr.rel (0) target = $region21
    $region20: #{tpu_custom_call.1} parent=1 // pred_region
      %s2463 = ssub.s32 8192, 8192
      %2464 = vsyncadd [#allocation4], %s2463
      %s2465 = sshll.u32 [#allocation7], 4
      %s2466 = int_to_ptr.vmem [resolvable:$true] %s2465
      %2471 = dma.vmem_to_hbm [thread:$0]  %s2466, 8192, %s2, [#allocation4], 256, 256, 16
    $region21: #{tpu_custom_call.1} parent=1 // pred_fallthru
      _
    // Predicated region
    $region22: #{tpu_custom_call.1} parent=1 // pred_check
      _
    $region23: #{tpu_custom_call.1} parent=1 // pred_check_branch
      %2473 = sbr.rel (0) target = $region25
    $region24: #{tpu_custom_call.1} parent=1 // pred_region
      %2474 = dma.done [#allocation4], 8192
    $region25: #{tpu_custom_call.1} parent=1 // pred_fallthru
      _
    %2475 = vsyncpa [#allocation3], 1
    %2476 = vsyncpa [#allocation6], 1
    %2477 = vsyncpa [#allocation4], 1

</llo_original>
